<compile_context>
chip_gen: v7x
topology: tpu7x:2x2x1
jax: 0.10.0
libtpu: 0.0.40
codegen_flags: <defaults>
</compile_context>

<pallas_src>
import jax
import jax.numpy as jnp
from jax import lax
from jax.experimental import pallas as pl
from jax.experimental.pallas import tpu as pltpu


# ----------------------------------------------------------------------------
# Fused kernel: Conv1d (+ folded attention logits) -> span softmax ->
#               BN -> Linear -> ReLU -> BN -> [Dropout eval] -> final Linear
# ----------------------------------------------------------------------------
def _head_kernel(x_ref,      # VMEM (1, T, H)       bert outputs (unpadded)
                 off_ref,    # VMEM (1, 2, S) int32 span [starts; ends] (incl.)
                 wfa_ref,    # VMEM (k*H, D+1)      conv weight, tap-major flat,
                             #                      attention column folded in
                 cba_ref,    # VMEM (1, D+1)        conv bias (+ folded attn bias)
                 s1_ref,     # VMEM (S, D)          BN1 scale (eval, folded)
                 t1_ref,     # VMEM (S, D)          BN1 shift
                 w1_ref,     # VMEM (S, D, hidden)  fc Linear weight per span
                 b1_ref,     # VMEM (1, hidden)
                 s2_ref,     # VMEM (1, hidden)     BN2 scale
                 t2_ref,     # VMEM (1, hidden)     BN2 shift
                 w2a_ref,    # VMEM (hidden, 3)     last Linear (fc part)
                 w2b_ref,    # VMEM (n_extra, 3)    last Linear (extra feats part)
                 b2_ref,     # VMEM (1, 3)
                 feat_ref,   # VMEM (1, 1, n_extra) [in_urls | other_feats]
                 out_ref,    # VMEM (1, 1, 3)
                 slab_ref):  # VMEM scratch (T, k*H) im2col slab
    T, H = x_ref.shape[1], x_ref.shape[2]
    kH = wfa_ref.shape[0]
    k = kH // H
    c = (k - 1) // 2                      # Conv1d padding == cnn_context
    S, D = s1_ref.shape

    x = x_ref[0]                          # (T, H)

    # ---- im2col slab: k shifted copies of x, zero halo rows (the Conv1d
    #      zero padding).  No host pad, no in-kernel concatenate: only
    #      static slice stores into a VMEM scratch.
    slab_ref[...] = jnp.zeros_like(slab_ref)
    for j in range(k):
        d = j - c                         # row shift of this tap
        lo, hi = j * H, (j + 1) * H       # lane block of this tap
        if d < 0:
            slab_ref[(-d):T, lo:hi] = x[0:T + d, :]
        elif d == 0:
            slab_ref[:, lo:hi] = x
        else:
            slab_ref[0:(T - d), lo:hi] = x[d:T, :]

    # ---- one MXU pass: columns 0..D-1 = Conv1d output, column D = the
    #      global-attention logits (Linear(D, 1) folded into the weights).
    conv_aug = jnp.dot(slab_ref[...], wfa_ref[...],
                       preferred_element_type=jnp.float32) + cba_ref[...]
    conv = conv_aug[:, 0:D]               # (T, D)
    logits = conv_aug[:, D:D + 1]         # (T, 1)

    # ---- vectorized masked softmax over all S spans at once: (T, S).
    off = off_ref[0]                      # (2, S) int32
    starts = off[0:1, :]                  # (1, S)
    ends = off[1:2, :]                    # (1, S)
    pos = lax.broadcasted_iota(jnp.int32, (T, S), 0)
    mask = jnp.logical_and(pos >= starts, pos <= ends)          # (T, S)
    lg = jnp.broadcast_to(logits, (T, S))
    ml = jnp.where(mask, lg, jnp.full((T, S), -1e30, jnp.float32))
    m = jnp.max(ml, axis=0, keepdims=True)                      # (1, S)
    p = jnp.where(mask, jnp.exp(ml - m), jnp.zeros((T, S), jnp.float32))
    wts = p / (jnp.sum(p, axis=0, keepdims=True) + 1e-13)       # (T, S)

    # ---- span-attend + fused MLP epilogue.  BN (eval) is a per-feature
    #      scale/shift and Linear(3D -> hidden) splits into per-span
    #      (D, hidden) blocks, so the extracted rows never get flattened,
    #      concatenated, or written to HBM.
    h = b1_ref[...]                                             # (1, hidden)
    for s in range(S):
        row = jnp.sum(wts[:, s:s + 1] * conv, axis=0, keepdims=True)   # (1, D)
        row = row * s1_ref[s:s + 1, :] + t1_ref[s:s + 1, :]     # BN1 (eval)
        h = h + jnp.dot(row, w1_ref[s], preferred_element_type=jnp.float32)
    h = jnp.maximum(h, 0.0)                                     # ReLU
    h = h * s2_ref[...] + t2_ref[...]                           # BN2 (eval)
    # Dropout(p=0.6) is identity in eval mode.
    out_ref[0] = (jnp.dot(h, w2a_ref[...], preferred_element_type=jnp.float32)
                  + jnp.dot(feat_ref[0], w2b_ref[...],
                            preferred_element_type=jnp.float32)
                  + b2_ref[...])


# ----------------------------------------------------------------------------
# Wrapper: parameter-sized refolds only (no data-sized host work), one call.
# ----------------------------------------------------------------------------
def head_forward(bert_outputs, offsets, in_urls, other_feats, params):
    B, T, H = bert_outputs.shape
    conv_w = params["conv_w"]                        # (k, H, D) tap-major
    k, _, D = conv_w.shape
    S = offsets.shape[1]
    hidden = params["w1"].shape[1]

    # Fold the attention Linear(D, 1) into the conv matmul as an extra column.
    wflat = conv_w.reshape(k * H, D)                            # (k*H, D)
    wfa = jnp.concatenate([wflat, wflat @ params["attn_w"]], axis=1)
    cba = jnp.concatenate(
        [params["conv_b"],
         params["conv_b"] @ params["attn_w"] + params["attn_b"]], axis=1)

    s1 = params["bn1_scale"].reshape(S, D)
    t1 = params["bn1_shift"].reshape(S, D)
    w1 = params["w1"].reshape(S, D, hidden)
    w2a = params["w2"][:hidden]                                 # (hidden, 3)
    w2b = params["w2"][hidden:]                                 # (n_extra, 3)
    feats = jnp.concatenate([in_urls, other_feats], axis=1)[:, None, :]
    n_extra = feats.shape[-1]
    off_t = jnp.transpose(offsets, (0, 2, 1)).astype(jnp.int32)  # (B, 2, S)

    out = pl.pallas_call(
        _head_kernel,
        out_shape=jax.ShapeDtypeStruct((B, 1, 3), jnp.float32),
        grid_spec=pltpu.PrefetchScalarGridSpec(
            num_scalar_prefetch=0,
            grid=(B,),
            in_specs=[
                pl.BlockSpec((1, T, H), lambda b: (b, 0, 0)),
                pl.BlockSpec((1, 2, S), lambda b: (b, 0, 0)),
                pl.BlockSpec((k * H, D + 1), lambda b: (0, 0)),
                pl.BlockSpec((1, D + 1), lambda b: (0, 0)),
                pl.BlockSpec((S, D), lambda b: (0, 0)),
                pl.BlockSpec((S, D), lambda b: (0, 0)),
                pl.BlockSpec((S, D, hidden), lambda b: (0, 0, 0)),
                pl.BlockSpec((1, hidden), lambda b: (0, 0)),
                pl.BlockSpec((1, hidden), lambda b: (0, 0)),
                pl.BlockSpec((1, hidden), lambda b: (0, 0)),
                pl.BlockSpec((hidden, 3), lambda b: (0, 0)),
                pl.BlockSpec((n_extra, 3), lambda b: (0, 0)),
                pl.BlockSpec((1, 3), lambda b: (0, 0)),
                pl.BlockSpec((1, 1, n_extra), lambda b: (b, 0, 0)),
            ],
            out_specs=pl.BlockSpec((1, 1, 3), lambda b: (b, 0, 0)),
            scratch_shapes=[pltpu.VMEM((T, k * H), jnp.float32)],
        ),
        compiler_params=pltpu.CompilerParams(
            dimension_semantics=("parallel",),
            # Modest headroom (raises v5e's 16 MiB default; <= physical on all
            # gens).  Long-sequence configs on v7x should add a T-tile axis.
            vmem_limit_bytes=32 * 1024 * 1024,
        ),
    )(bert_outputs, off_t, wfa, cba, s1, t1, w1,
      params["b1"], params["bn2_scale"], params["bn2_shift"],
      w2a, w2b, params["b2"], feats)
    return out.reshape(B, 3)


# ----------------------------------------------------------------------------
# Pure-JAX reference (same eval-mode math, no Pallas) for a sanity check.
# ----------------------------------------------------------------------------
def head_forward_ref(bert_outputs, offsets, in_urls, other_feats, params):
    B, T, H = bert_outputs.shape
    c = params["cnn_context"]
    k = params["conv_w"].shape[0]
    xpad = jnp.pad(bert_outputs, ((0, 0), (c, c), (0, 0)))
    conv = sum(jnp.einsum("bth,hd->btd", xpad[:, j:j + T, :],
                          params["conv_w"][j]) for j in range(k))
    conv = conv + params["conv_b"][None]                        # (B, T, D)
    logits = jnp.einsum("btd,do->bto", conv, params["attn_w"])[..., 0]
    logits = logits + params["attn_b"][0, 0]                    # (B, T)

    pos = jnp.arange(T)[None, None, :]
    starts = offsets[:, :, 0:1]
    ends = offsets[:, :, 1:2]
    mask = (pos >= starts) & (pos <= ends)                      # (B, S, T)
    lg = jnp.broadcast_to(logits[:, None, :], mask.shape)
    ml = jnp.where(mask, lg, -1e30)
    m = jnp.max(ml, axis=-1, keepdims=True)
    e = jnp.where(mask, jnp.exp(ml - m), 0.0)
    w = e / (jnp.sum(e, axis=-1, keepdims=True) + 1e-13)
    extracted = jnp.einsum("bst,btd->bsd", w, conv).reshape(B, -1)

    h = extracted * params["bn1_scale"] + params["bn1_shift"]
    h = h @ params["w1"] + params["b1"]
    h = jnp.maximum(h, 0.0)
    h = h * params["bn2_scale"] + params["bn2_shift"]
    cat = jnp.concatenate([h, in_urls, other_feats], axis=1)
    return cat @ params["w2"] + params["b2"]


if __name__ == "__main__":
    # Small shapes consistent with the module's forward (H lane-aligned).
    B, T = 2, 16
    bert_hidden, cnn_context, hidden_size = 128, 1, 64
    D = 64                         # proj_dim (fixed by the module)
    k = 1 + 2 * cnn_context
    n_spans = 3
    n_extra = 9 + 1 + 3 + 2 + 2    # = 17 extra features fed to new_last_layer

    key = jax.random.PRNGKey(0)
    ks = jax.random.split(key, 10)

    bert_outputs = jax.random.normal(ks[0], (B, T, bert_hidden), jnp.float32)
    in_urls = jax.random.normal(ks[1], (B, 3), jnp.float32)
    other_feats = jax.random.normal(ks[2], (B, n_extra - 3), jnp.float32)
    offsets = jnp.array([[[1, 3], [5, 5], [8, 12]],
                         [[0, 2], [4, 7], [10, 15]]], dtype=jnp.int32)

    eps = 1e-5
    params = {
        "cnn_context": cnn_context,
        # Conv1d(H -> 64, kernel=k, padding=c), stored tap-major (k, H, D)
        # (PyTorch weight (D, H, k) -> permute(2, 1, 0)).
        "conv_w": jax.random.normal(ks[3], (k, bert_hidden, D), jnp.float32)
                  / jnp.sqrt(float(k * bert_hidden)),
        "conv_b": jax.random.normal(ks[4], (1, D), jnp.float32) * 0.1,
        # SelfAttentiveSpanExtractor global attention Linear(D, 1).
        "attn_w": jax.random.normal(ks[5], (D, 1), jnp.float32)
                  / jnp.sqrt(float(D)),
        "attn_b": jnp.zeros((1, 1), jnp.float32),
        # BatchNorm1d(3*D) eval form: gamma=1, beta=0, running stats (0, 1).
        "bn1_scale": jnp.full((1, 3 * D), 1.0 / jnp.sqrt(1.0 + eps), jnp.float32),
        "bn1_shift": jnp.zeros((1, 3 * D), jnp.float32),
        # Linear(3*D -> hidden), kaiming-normal weight, zero bias.
        "w1": jax.random.normal(ks[6], (3 * D, hidden_size), jnp.float32)
              * jnp.sqrt(2.0 / (3 * D)),
        "b1": jnp.zeros((1, hidden_size), jnp.float32),
        "bn2_scale": jnp.full((1, hidden_size), 1.0 / jnp.sqrt(1.0 + eps),
                              jnp.float32),
        "bn2_shift": jnp.zeros((1, hidden_size), jnp.float32),
        # new_last_layer: Linear(hidden + 17 -> 3).
        "w2": jax.random.normal(ks[7], (hidden_size + n_extra, 3), jnp.float32)
              / jnp.sqrt(float(hidden_size + n_extra)),
        "b2": jax.random.normal(ks[8], (1, 3), jnp.float32) * 0.1,
    }

    out = head_forward(bert_outputs, offsets, in_urls, other_feats, params)
    out = jax.block_until_ready(out)
    assert out.shape == (B, 3)

    ref = head_forward_ref(bert_outputs, offsets, in_urls, other_feats, params)
    ref = jax.block_until_ready(ref)
    assert jnp.allclose(out, ref, atol=2e-3, rtol=2e-3), (out, ref)

    print("KERNEL_OK")
</pallas_src>

<mosaic_0001>
module attributes {stable_mosaic.version = 11 : i64} {
  func.func @_head_kernel(%arg0: i32, %arg1: memref<1x16x128xf32, #tpu.memory_space<vmem>>, %arg2: memref<1x2x3xi32, #tpu.memory_space<vmem>>, %arg3: memref<384x65xf32, #tpu.memory_space<vmem>>, %arg4: memref<1x65xf32, #tpu.memory_space<vmem>>, %arg5: memref<3x64xf32, #tpu.memory_space<vmem>>, %arg6: memref<3x64xf32, #tpu.memory_space<vmem>>, %arg7: memref<3x64x64xf32, #tpu.memory_space<vmem>>, %arg8: memref<1x64xf32, #tpu.memory_space<vmem>>, %arg9: memref<1x64xf32, #tpu.memory_space<vmem>>, %arg10: memref<1x64xf32, #tpu.memory_space<vmem>>, %arg11: memref<64x3xf32, #tpu.memory_space<vmem>>, %arg12: memref<17x3xf32, #tpu.memory_space<vmem>>, %arg13: memref<1x3xf32, #tpu.memory_space<vmem>>, %arg14: memref<1x1x17xf32, #tpu.memory_space<vmem>>, %arg15: memref<1x1x3xf32, #tpu.memory_space<vmem>>, %arg16: memref<16x384xf32, #tpu.memory_space<vmem>>) attributes {dimension_semantics = [#tpu.dimension_semantics<parallel>], iteration_bounds = array<i64: 2>, scalar_prefetch = 0 : i64, scratch_operands = 1 : i64, tpu.core_type = #tpu.core_type<tc>, window_params = [{transform_indices = @transform_0, window_bounds = array<i64: 1, 16, 128>}, {transform_indices = @transform_1, window_bounds = array<i64: 1, 2, 3>}, {pipeline_mode = #tpu.pipeline_mode<synchronous>, transform_indices = @transform_2, window_bounds = array<i64: 384, 65>}, {pipeline_mode = #tpu.pipeline_mode<synchronous>, transform_indices = @transform_3, window_bounds = array<i64: 1, 65>}, {pipeline_mode = #tpu.pipeline_mode<synchronous>, transform_indices = @transform_4, window_bounds = array<i64: 3, 64>}, {pipeline_mode = #tpu.pipeline_mode<synchronous>, transform_indices = @transform_5, window_bounds = array<i64: 3, 64>}, {pipeline_mode = #tpu.pipeline_mode<synchronous>, transform_indices = @transform_6, window_bounds = array<i64: 3, 64, 64>}, {pipeline_mode = #tpu.pipeline_mode<synchronous>, transform_indices = @transform_7, window_bounds = array<i64: 1, 64>}, {pipeline_mode = #tpu.pipeline_mode<synchronous>, transform_indices = @transform_8, window_bounds = array<i64: 1, 64>}, {pipeline_mode = #tpu.pipeline_mode<synchronous>, transform_indices = @transform_9, window_bounds = array<i64: 1, 64>}, {pipeline_mode = #tpu.pipeline_mode<synchronous>, transform_indices = @transform_10, window_bounds = array<i64: 64, 3>}, {pipeline_mode = #tpu.pipeline_mode<synchronous>, transform_indices = @transform_11, window_bounds = array<i64: 17, 3>}, {pipeline_mode = #tpu.pipeline_mode<synchronous>, transform_indices = @transform_12, window_bounds = array<i64: 1, 3>}, {transform_indices = @transform_13, window_bounds = array<i64: 1, 1, 17>}, {transform_indices = @transform_14, window_bounds = array<i64: 1, 1, 3>}]} {
    %c0 = arith.constant 0 : index
    %c0_0 = arith.constant 0 : index
    %c0_1 = arith.constant 0 : index
    %0 = vector.load %arg1[%c0, %c0_0, %c0_1] : memref<1x16x128xf32, #tpu.memory_space<vmem>>, vector<1x16x128xf32>
    %1 = vector.shape_cast %0 : vector<1x16x128xf32> to vector<16x128xf32>
    %cst = arith.constant 0.000000e+00 : f32
    %2 = vector.broadcast %cst : f32 to vector<16x384xf32>
    %c0_2 = arith.constant 0 : index
    %c0_3 = arith.constant 0 : index
    %3 = vector.load %arg16[%c0_2, %c0_3] : memref<16x384xf32, #tpu.memory_space<vmem>>, vector<16x384xf32>
    tpu.vector_store %arg16[%c0_2, %c0_3], %2 {strides = array<i32>} : memref<16x384xf32, #tpu.memory_space<vmem>>, vector<16x384xf32>,
    %4 = vector.extract_strided_slice %1 {offsets = [0, 0], sizes = [15, 128], strides = [1, 1]} : vector<16x128xf32> to vector<15x128xf32>
    %c1 = arith.constant 1 : index
    %c0_4 = arith.constant 0 : index
    %5 = vector.load %arg16[%c1, %c0_4] : memref<16x384xf32, #tpu.memory_space<vmem>>, vector<15x128xf32>
    tpu.vector_store %arg16[%c1, %c0_4], %4 {strides = array<i32>} : memref<16x384xf32, #tpu.memory_space<vmem>>, vector<15x128xf32>,
    %c0_5 = arith.constant 0 : index
    %c128 = arith.constant 128 : index
    %6 = vector.load %arg16[%c0_5, %c128] : memref<16x384xf32, #tpu.memory_space<vmem>>, vector<16x128xf32>
    tpu.vector_store %arg16[%c0_5, %c128], %1 {strides = array<i32>} : memref<16x384xf32, #tpu.memory_space<vmem>>, vector<16x128xf32>,
    %7 = vector.extract_strided_slice %1 {offsets = [1, 0], sizes = [15, 128], strides = [1, 1]} : vector<16x128xf32> to vector<15x128xf32>
    %c0_6 = arith.constant 0 : index
    %c256 = arith.constant 256 : index
    %8 = vector.load %arg16[%c0_6, %c256] : memref<16x384xf32, #tpu.memory_space<vmem>>, vector<15x128xf32>
    tpu.vector_store %arg16[%c0_6, %c256], %7 {strides = array<i32>} : memref<16x384xf32, #tpu.memory_space<vmem>>, vector<15x128xf32>,
    %c0_7 = arith.constant 0 : index
    %c0_8 = arith.constant 0 : index
    %9 = vector.load %arg16[%c0_7, %c0_8] : memref<16x384xf32, #tpu.memory_space<vmem>>, vector<16x384xf32>
    %c0_9 = arith.constant 0 : index
    %c0_10 = arith.constant 0 : index
    %10 = vector.load %arg3[%c0_9, %c0_10] : memref<384x65xf32, #tpu.memory_space<vmem>>, vector<384x65xf32>
    %cst_11 = arith.constant dense<0.000000e+00> : vector<16x65xf32>
    %11 = tpu.matmul %9, %10, %cst_11 {dimension_numbers = #tpu.dot_dimension_numbers<[1], [0], [0], [1], [0, 0, 1, 1], [], []>} : vector<16x384xf32>, vector<384x65xf32>, vector<16x65xf32> -> vector<16x65xf32>
    %c0_12 = arith.constant 0 : index
    %c0_13 = arith.constant 0 : index
    %12 = vector.load %arg4[%c0_12, %c0_13] : memref<1x65xf32, #tpu.memory_space<vmem>>, vector<1x65xf32>
    %13 = vector.broadcast %12 : vector<1x65xf32> to vector<16x65xf32>
    %14 = arith.addf %11, %13 : vector<16x65xf32>
    %15 = vector.extract_strided_slice %14 {offsets = [0, 0], sizes = [16, 64], strides = [1, 1]} : vector<16x65xf32> to vector<16x64xf32>
    %16 = vector.extract_strided_slice %14 {offsets = [0, 64], sizes = [16, 1], strides = [1, 1]} : vector<16x65xf32> to vector<16x1xf32>
    %c0_14 = arith.constant 0 : index
    %c0_15 = arith.constant 0 : index
    %c0_16 = arith.constant 0 : index
    %17 = vector.load %arg2[%c0_14, %c0_15, %c0_16] : memref<1x2x3xi32, #tpu.memory_space<vmem>>, vector<1x2x3xi32>
    %18 = vector.shape_cast %17 : vector<1x2x3xi32> to vector<2x3xi32>
    %19 = vector.extract_strided_slice %18 {offsets = [0, 0], sizes = [1, 3], strides = [1, 1]} : vector<2x3xi32> to vector<1x3xi32>
    %20 = vector.extract_strided_slice %18 {offsets = [1, 0], sizes = [1, 3], strides = [1, 1]} : vector<2x3xi32> to vector<1x3xi32>
    %21 = tpu.iota {dimensions = array<i32: 0>} : vector<16x3xi32>
    %22 = vector.broadcast %19 : vector<1x3xi32> to vector<16x3xi32>
    %23 = arith.cmpi sge, %21, %22 : vector<16x3xi32>
    %24 = vector.broadcast %20 : vector<1x3xi32> to vector<16x3xi32>
    %25 = arith.cmpi sle, %21, %24 : vector<16x3xi32>
    %26 = arith.andi %23, %25 : vector<16x3xi1>
    %27 = vector.shape_cast %16 : vector<16x1xf32> to vector<16x1xf32>
    %28 = vector.broadcast %27 : vector<16x1xf32> to vector<16x3xf32>
    %cst_17 = arith.constant -1.000000e+30 : f32
    %29 = vector.broadcast %cst_17 : f32 to vector<16x3xf32>
    %30 = arith.select %26, %28, %29 : vector<16x3xi1>, vector<16x3xf32>
    %cst_18 = arith.constant dense<0xFF800000> : vector<3xf32>
    %31 = vector.multi_reduction <maximumf>, %30, %cst_18 [0] : vector<16x3xf32> to vector<3xf32>
    %32 = vector.shape_cast %31 : vector<3xf32> to vector<1x3xf32>
    %33 = vector.broadcast %32 : vector<1x3xf32> to vector<16x3xf32>
    %34 = arith.subf %30, %33 : vector<16x3xf32>
    %35 = math.exp %34 : vector<16x3xf32>
    %cst_19 = arith.constant 0.000000e+00 : f32
    %36 = vector.broadcast %cst_19 : f32 to vector<16x3xf32>
    %37 = arith.select %26, %35, %36 : vector<16x3xi1>, vector<16x3xf32>
    %cst_20 = arith.constant dense<0.000000e+00> : vector<3xf32>
    %38 = vector.multi_reduction <add>, %37, %cst_20 [0] : vector<16x3xf32> to vector<3xf32>
    %39 = vector.shape_cast %38 : vector<3xf32> to vector<1x3xf32>
    %cst_21 = arith.constant 9.99999982E-14 : f32
    %40 = vector.broadcast %cst_21 : f32 to vector<1x3xf32>
    %41 = arith.addf %39, %40 : vector<1x3xf32>
    %42 = vector.broadcast %41 : vector<1x3xf32> to vector<16x3xf32>
    %43 = arith.divf %37, %42 : vector<16x3xf32>
    %c0_22 = arith.constant 0 : index
    %c0_23 = arith.constant 0 : index
    %44 = vector.load %arg8[%c0_22, %c0_23] : memref<1x64xf32, #tpu.memory_space<vmem>>, vector<1x64xf32>
    %45 = vector.extract_strided_slice %43 {offsets = [0, 0], sizes = [16, 1], strides = [1, 1]} : vector<16x3xf32> to vector<16x1xf32>
    %46 = vector.broadcast %45 : vector<16x1xf32> to vector<16x64xf32>
    %47 = arith.mulf %46, %15 : vector<16x64xf32>
    %cst_24 = arith.constant dense<0.000000e+00> : vector<64xf32>
    %48 = vector.multi_reduction <add>, %47, %cst_24 [0] : vector<16x64xf32> to vector<64xf32>
    %49 = vector.shape_cast %48 : vector<64xf32> to vector<1x64xf32>
    %c0_25 = arith.constant 0 : index
    %c0_26 = arith.constant 0 : index
    %50 = vector.load %arg5[%c0_25, %c0_26] : memref<3x64xf32, #tpu.memory_space<vmem>>, vector<1x64xf32>
    %51 = arith.mulf %49, %50 : vector<1x64xf32>
    %c0_27 = arith.constant 0 : index
    %c0_28 = arith.constant 0 : index
    %52 = vector.load %arg6[%c0_27, %c0_28] : memref<3x64xf32, #tpu.memory_space<vmem>>, vector<1x64xf32>
    %53 = arith.addf %51, %52 : vector<1x64xf32>
    %c0_29 = arith.constant 0 : index
    %c0_30 = arith.constant 0 : index
    %c0_31 = arith.constant 0 : index
    %54 = vector.load %arg7[%c0_29, %c0_30, %c0_31] : memref<3x64x64xf32, #tpu.memory_space<vmem>>, vector<1x64x64xf32>
    %55 = vector.shape_cast %54 : vector<1x64x64xf32> to vector<64x64xf32>
    %cst_32 = arith.constant dense<0.000000e+00> : vector<1x64xf32>
    %56 = tpu.matmul %53, %55, %cst_32 {dimension_numbers = #tpu.dot_dimension_numbers<[1], [0], [0], [1], [0, 0, 1, 1], [], []>} : vector<1x64xf32>, vector<64x64xf32>, vector<1x64xf32> -> vector<1x64xf32>
    %57 = arith.addf %44, %56 : vector<1x64xf32>
    %58 = vector.extract_strided_slice %43 {offsets = [0, 1], sizes = [16, 1], strides = [1, 1]} : vector<16x3xf32> to vector<16x1xf32>
    %59 = vector.broadcast %58 : vector<16x1xf32> to vector<16x64xf32>
    %60 = arith.mulf %59, %15 : vector<16x64xf32>
    %cst_33 = arith.constant dense<0.000000e+00> : vector<64xf32>
    %61 = vector.multi_reduction <add>, %60, %cst_33 [0] : vector<16x64xf32> to vector<64xf32>
    %62 = vector.shape_cast %61 : vector<64xf32> to vector<1x64xf32>
    %c1_34 = arith.constant 1 : index
    %c0_35 = arith.constant 0 : index
    %63 = vector.load %arg5[%c1_34, %c0_35] : memref<3x64xf32, #tpu.memory_space<vmem>>, vector<1x64xf32>
    %64 = arith.mulf %62, %63 : vector<1x64xf32>
    %c1_36 = arith.constant 1 : index
    %c0_37 = arith.constant 0 : index
    %65 = vector.load %arg6[%c1_36, %c0_37] : memref<3x64xf32, #tpu.memory_space<vmem>>, vector<1x64xf32>
    %66 = arith.addf %64, %65 : vector<1x64xf32>
    %c1_38 = arith.constant 1 : index
    %c0_39 = arith.constant 0 : index
    %c0_40 = arith.constant 0 : index
    %67 = vector.load %arg7[%c1_38, %c0_39, %c0_40] : memref<3x64x64xf32, #tpu.memory_space<vmem>>, vector<1x64x64xf32>
    %68 = vector.shape_cast %67 : vector<1x64x64xf32> to vector<64x64xf32>
    %cst_41 = arith.constant dense<0.000000e+00> : vector<1x64xf32>
    %69 = tpu.matmul %66, %68, %cst_41 {dimension_numbers = #tpu.dot_dimension_numbers<[1], [0], [0], [1], [0, 0, 1, 1], [], []>} : vector<1x64xf32>, vector<64x64xf32>, vector<1x64xf32> -> vector<1x64xf32>
    %70 = arith.addf %57, %69 : vector<1x64xf32>
    %71 = vector.extract_strided_slice %43 {offsets = [0, 2], sizes = [16, 1], strides = [1, 1]} : vector<16x3xf32> to vector<16x1xf32>
    %72 = vector.broadcast %71 : vector<16x1xf32> to vector<16x64xf32>
    %73 = arith.mulf %72, %15 : vector<16x64xf32>
    %cst_42 = arith.constant dense<0.000000e+00> : vector<64xf32>
    %74 = vector.multi_reduction <add>, %73, %cst_42 [0] : vector<16x64xf32> to vector<64xf32>
    %75 = vector.shape_cast %74 : vector<64xf32> to vector<1x64xf32>
    %c2 = arith.constant 2 : index
    %c0_43 = arith.constant 0 : index
    %76 = vector.load %arg5[%c2, %c0_43] : memref<3x64xf32, #tpu.memory_space<vmem>>, vector<1x64xf32>
    %77 = arith.mulf %75, %76 : vector<1x64xf32>
    %c2_44 = arith.constant 2 : index
    %c0_45 = arith.constant 0 : index
    %78 = vector.load %arg6[%c2_44, %c0_45] : memref<3x64xf32, #tpu.memory_space<vmem>>, vector<1x64xf32>
    %79 = arith.addf %77, %78 : vector<1x64xf32>
    %c2_46 = arith.constant 2 : index
    %c0_47 = arith.constant 0 : index
    %c0_48 = arith.constant 0 : index
    %80 = vector.load %arg7[%c2_46, %c0_47, %c0_48] : memref<3x64x64xf32, #tpu.memory_space<vmem>>, vector<1x64x64xf32>
    %81 = vector.shape_cast %80 : vector<1x64x64xf32> to vector<64x64xf32>
    %cst_49 = arith.constant dense<0.000000e+00> : vector<1x64xf32>
    %82 = tpu.matmul %79, %81, %cst_49 {dimension_numbers = #tpu.dot_dimension_numbers<[1], [0], [0], [1], [0, 0, 1, 1], [], []>} : vector<1x64xf32>, vector<64x64xf32>, vector<1x64xf32> -> vector<1x64xf32>
    %83 = arith.addf %70, %82 : vector<1x64xf32>
    %cst_50 = arith.constant 0.000000e+00 : f32
    %84 = vector.broadcast %cst_50 : f32 to vector<1x64xf32>
    %85 = arith.maximumf %83, %84 : vector<1x64xf32>
    %c0_51 = arith.constant 0 : index
    %c0_52 = arith.constant 0 : index
    %86 = vector.load %arg9[%c0_51, %c0_52] : memref<1x64xf32, #tpu.memory_space<vmem>>, vector<1x64xf32>
    %87 = arith.mulf %85, %86 : vector<1x64xf32>
    %c0_53 = arith.constant 0 : index
    %c0_54 = arith.constant 0 : index
    %88 = vector.load %arg10[%c0_53, %c0_54] : memref<1x64xf32, #tpu.memory_space<vmem>>, vector<1x64xf32>
    %89 = arith.addf %87, %88 : vector<1x64xf32>
    %c0_55 = arith.constant 0 : index
    %c0_56 = arith.constant 0 : index
    %90 = vector.load %arg11[%c0_55, %c0_56] : memref<64x3xf32, #tpu.memory_space<vmem>>, vector<64x3xf32>
    %cst_57 = arith.constant dense<0.000000e+00> : vector<1x3xf32>
    %91 = tpu.matmul %89, %90, %cst_57 {dimension_numbers = #tpu.dot_dimension_numbers<[1], [0], [0], [1], [0, 0, 1, 1], [], []>} : vector<1x64xf32>, vector<64x3xf32>, vector<1x3xf32> -> vector<1x3xf32>
    %c0_58 = arith.constant 0 : index
    %c0_59 = arith.constant 0 : index
    %c0_60 = arith.constant 0 : index
    %92 = vector.load %arg14[%c0_58, %c0_59, %c0_60] : memref<1x1x17xf32, #tpu.memory_space<vmem>>, vector<1x1x17xf32>
    %93 = vector.shape_cast %92 : vector<1x1x17xf32> to vector<1x17xf32>
    %c0_61 = arith.constant 0 : index
    %c0_62 = arith.constant 0 : index
    %94 = vector.load %arg12[%c0_61, %c0_62] : memref<17x3xf32, #tpu.memory_space<vmem>>, vector<17x3xf32>
    %cst_63 = arith.constant dense<0.000000e+00> : vector<1x3xf32>
    %95 = tpu.matmul %93, %94, %cst_63 {dimension_numbers = #tpu.dot_dimension_numbers<[1], [0], [0], [1], [0, 0, 1, 1], [], []>} : vector<1x17xf32>, vector<17x3xf32>, vector<1x3xf32> -> vector<1x3xf32>
    %96 = arith.addf %91, %95 : vector<1x3xf32>
    %c0_64 = arith.constant 0 : index
    %c0_65 = arith.constant 0 : index
    %97 = vector.load %arg13[%c0_64, %c0_65] : memref<1x3xf32, #tpu.memory_space<vmem>>, vector<1x3xf32>
    %98 = arith.addf %96, %97 : vector<1x3xf32>
    %c0_66 = arith.constant 0 : index
    %c0_67 = arith.constant 0 : index
    %c0_68 = arith.constant 0 : index
    %99 = vector.load %arg15[%c0_66, %c0_67, %c0_68] : memref<1x1x3xf32, #tpu.memory_space<vmem>>, vector<1x1x3xf32>
    %100 = vector.shape_cast %99 : vector<1x1x3xf32> to vector<1x3xf32>
    %101 = vector.shape_cast %98 : vector<1x3xf32> to vector<1x1x3xf32>
    tpu.vector_store %arg15[%c0_66, %c0_67, %c0_68], %101 {strides = array<i32>} : memref<1x1x3xf32, #tpu.memory_space<vmem>>, vector<1x1x3xf32>,
    return
  }
  func.func @transform_0(%arg0: i32) -> (i32, i32, i32) {
    %c0_i32 = arith.constant 0 : i32
    %c0_i32_0 = arith.constant 0 : i32
    %c0_i32_1 = arith.constant 0 : i32
    return %arg0, %c0_i32, %c0_i32_0 : i32, i32, i32
  }
  func.func @transform_1(%arg0: i32) -> (i32, i32, i32) {
    %c0_i32 = arith.constant 0 : i32
    %c0_i32_0 = arith.constant 0 : i32
    %c0_i32_1 = arith.constant 0 : i32
    return %arg0, %c0_i32, %c0_i32_0 : i32, i32, i32
  }
  func.func @transform_2(%arg0: i32) -> (i32, i32) {
    %c0_i32 = arith.constant 0 : i32
    %c0_i32_0 = arith.constant 0 : i32
    %c0_i32_1 = arith.constant 0 : i32
    return %c0_i32, %c0_i32_0 : i32, i32
  }
  func.func @transform_3(%arg0: i32) -> (i32, i32) {
    %c0_i32 = arith.constant 0 : i32
    %c0_i32_0 = arith.constant 0 : i32
    %c0_i32_1 = arith.constant 0 : i32
    return %c0_i32, %c0_i32_0 : i32, i32
  }
  func.func @transform_4(%arg0: i32) -> (i32, i32) {
    %c0_i32 = arith.constant 0 : i32
    %c0_i32_0 = arith.constant 0 : i32
    %c0_i32_1 = arith.constant 0 : i32
    return %c0_i32, %c0_i32_0 : i32, i32
  }
  func.func @transform_5(%arg0: i32) -> (i32, i32) {
    %c0_i32 = arith.constant 0 : i32
    %c0_i32_0 = arith.constant 0 : i32
    %c0_i32_1 = arith.constant 0 : i32
    return %c0_i32, %c0_i32_0 : i32, i32
  }
  func.func @transform_6(%arg0: i32) -> (i32, i32, i32) {
    %c0_i32 = arith.constant 0 : i32
    %c0_i32_0 = arith.constant 0 : i32
    %c0_i32_1 = arith.constant 0 : i32
    %c0_i32_2 = arith.constant 0 : i32
    return %c0_i32, %c0_i32_0, %c0_i32_1 : i32, i32, i32
  }
  func.func @transform_7(%arg0: i32) -> (i32, i32) {
    %c0_i32 = arith.constant 0 : i32
    %c0_i32_0 = arith.constant 0 : i32
    %c0_i32_1 = arith.constant 0 : i32
    return %c0_i32, %c0_i32_0 : i32, i32
  }
  func.func @transform_8(%arg0: i32) -> (i32, i32) {
    %c0_i32 = arith.constant 0 : i32
    %c0_i32_0 = arith.constant 0 : i32
    %c0_i32_1 = arith.constant 0 : i32
    return %c0_i32, %c0_i32_0 : i32, i32
  }
  func.func @transform_9(%arg0: i32) -> (i32, i32) {
    %c0_i32 = arith.constant 0 : i32
    %c0_i32_0 = arith.constant 0 : i32
    %c0_i32_1 = arith.constant 0 : i32
    return %c0_i32, %c0_i32_0 : i32, i32
  }
  func.func @transform_10(%arg0: i32) -> (i32, i32) {
    %c0_i32 = arith.constant 0 : i32
    %c0_i32_0 = arith.constant 0 : i32
    %c0_i32_1 = arith.constant 0 : i32
    return %c0_i32, %c0_i32_0 : i32, i32
  }
  func.func @transform_11(%arg0: i32) -> (i32, i32) {
    %c0_i32 = arith.constant 0 : i32
    %c0_i32_0 = arith.constant 0 : i32
    %c0_i32_1 = arith.constant 0 : i32
    return %c0_i32, %c0_i32_0 : i32, i32
  }
  func.func @transform_12(%arg0: i32) -> (i32, i32) {
    %c0_i32 = arith.constant 0 : i32
    %c0_i32_0 = arith.constant 0 : i32
    %c0_i32_1 = arith.constant 0 : i32
    return %c0_i32, %c0_i32_0 : i32, i32
  }
  func.func @transform_13(%arg0: i32) -> (i32, i32, i32) {
    %c0_i32 = arith.constant 0 : i32
    %c0_i32_0 = arith.constant 0 : i32
    %c0_i32_1 = arith.constant 0 : i32
    return %arg0, %c0_i32, %c0_i32_0 : i32, i32, i32
  }
  func.func @transform_14(%arg0: i32) -> (i32, i32, i32) {
    %c0_i32 = arith.constant 0 : i32
    %c0_i32_0 = arith.constant 0 : i32
    %c0_i32_1 = arith.constant 0 : i32
    return %arg0, %c0_i32, %c0_i32_0 : i32, i32, i32
  }
}

</mosaic_0001>

<llo_original>
// kernel: tpu_custom_call.1
$region0: #{tpu_custom_call.1}
  #allocation0 [shape = 'u32[]', space=smem, size = 0x4, offset = 0x4, fixed_abs, tag = 'smem constant byte address 0x4 - core index']
  #allocation1 [shape = 'u32[144,128]{1,0:T(1,128)}', space=vmem, size = 0x12000, scoped, tag = 'internal scratch']
  #allocation2 [shape = 'f32[16,384]{1,0:T(8,128)}', space=vmem, size = 0x6000, scoped, tag = 'scratch operand']
  %s0 = inlined_call_operand.vmem [shape: f32[2,16,128], index: 0, kind: input, shape index: {}]
  %s1 = inlined_call_operand.vmem [shape: s32[2,2,3], index: 1, kind: input, shape index: {}]
  %s2 = inlined_call_operand.vmem [shape: f32[384,65], index: 2, kind: input, shape index: {}]
  %s3 = inlined_call_operand.vmem [shape: f32[1,65], index: 3, kind: input, shape index: {}]
  %s4 = inlined_call_operand.vmem [shape: f32[3,64], index: 4, kind: input, shape index: {}]
  %s5 = inlined_call_operand.vmem [shape: f32[3,64], index: 5, kind: input, shape index: {}]
  %s6 = inlined_call_operand.vmem [shape: f32[3,64,64], index: 6, kind: input, shape index: {}]
  %s7 = inlined_call_operand.vmem [shape: f32[1,64], index: 7, kind: input, shape index: {}]
  %s8 = inlined_call_operand.vmem [shape: f32[1,64], index: 8, kind: input, shape index: {}]
  %s9 = inlined_call_operand.vmem [shape: f32[1,64], index: 9, kind: input, shape index: {}]
  %s10 = inlined_call_operand.vmem [shape: f32[64,3], index: 10, kind: input, shape index: {}]
  %s11 = inlined_call_operand.vmem [shape: f32[17,3], index: 11, kind: input, shape index: {}]
  %s12 = inlined_call_operand.vmem [shape: f32[1,3], index: 12, kind: input, shape index: {}]
  %s13 = inlined_call_operand.vmem [shape: f32[2,1,17], index: 13, kind: input, shape index: {}]
  %s14 = inlined_call_operand.hbm [shape: f32[2,1,3], index: 14, kind: output, shape index: {}]
  %s15 = sld [smem:[#allocation0]]
  $region89: #{tpu_custom_call.1} parent=0
    _
  %s17 = ssub.s32 1, %s15
  %s18 = scalar_select 0, %s17, %s15
  $region1: #{tpu_custom_call.1} parent=0
    #allocation3 [shape = 'u8[1024]{0}', space=vmem, size = 0x400, scoped, tag = 'output window, operand 0']
    #allocation4 [shape = 's32[2]{0}', space=sflag, size = 0x8, scoped, tag = 'scoped memory for tpu_custom_call.1']
    %19 = vsyncpa [#allocation4], 0
    %s20 = scalar_lea.sflag [#allocation4], 1
    %21 = vsyncpa %s20, 0
    loop: start=0, step=1, limit=4
    $region2: #{tpu_custom_call.1} parent=1 // loop_pre_header
      _
    $region3: #{tpu_custom_call.1} parent=1 // loop_header
      %s23 = sphi 0, %s27
      %p24 = scmp.ge.s32.totalorder %s23, 4
      %s33 = sphi 0, %s35
      %s36 = sphi 0, %s33
      %s37 = sphi 0, %s36
      %s53 = sphi 0, %s37
      %s59 = sphi 0, %s61
      %s62 = sphi 0, %s59
      %s63 = sphi 0, %s62
      %s79 = sphi 0, %s63
      %s83 = sphi 0, %s83
      %s85 = sphi 0, %s83
      %s86 = sphi 0, %s85
      %s100 = sphi 0, %s86
      %s104 = sphi 0, %s104
      %s106 = sphi 0, %s104
      %s107 = sphi 0, %s106
      %s121 = sphi 0, %s107
      %s125 = sphi 0, %s125
      %s127 = sphi 0, %s125
      %s128 = sphi 0, %s127
      %s142 = sphi 0, %s128
      %s146 = sphi 0, %s146
      %s148 = sphi 0, %s146
      %s149 = sphi 0, %s148
      %s163 = sphi 0, %s149
      %s167 = sphi 0, %s167
      %s169 = sphi 0, %s167
      %s170 = sphi 0, %s169
      %s184 = sphi 0, %s170
      %s188 = sphi 0, %s188
      %s190 = sphi 0, %s188
      %s191 = sphi 0, %s190
      %s205 = sphi 0, %s191
      %s209 = sphi 0, %s209
      %s211 = sphi 0, %s209
      %s212 = sphi 0, %s211
      %s226 = sphi 0, %s212
      %s230 = sphi 0, %s230
      %s232 = sphi 0, %s230
      %s233 = sphi 0, %s232
      %s247 = sphi 0, %s233
      %s251 = sphi 0, %s251
      %s253 = sphi 0, %s251
      %s254 = sphi 0, %s253
      %s268 = sphi 0, %s254
      %s272 = sphi 0, %s272
      %s274 = sphi 0, %s272
      %s275 = sphi 0, %s274
      %s289 = sphi 0, %s275
      %s293 = sphi 0, %s293
      %s295 = sphi 0, %s293
      %s296 = sphi 0, %s295
      %s310 = sphi 0, %s296
      %s316 = sphi 0, %s318
      %s319 = sphi 0, %s316
      %s320 = sphi 0, %s319
      %s336 = sphi 0, %s320
      %s342 = sphi 0, %s344
      %s345 = sphi 0, %s342
      %s346 = sphi 0, %s345
      %s362 = sphi 0, %s346
    $region4: #{tpu_custom_call.1} parent=1 // loop_header_branch
      %26 = sbr.rel (%p24) target = $region8
    $region5: #{tpu_custom_call.1} parent=1 // loop_body
      %s28 = ssub.s32 %s23, 1
      %s29 = ssub.s32 %s23, 2
      %s30 = sadd.s32 %s23, 1
      %s31 = ssub.s32 %s23, %s30
      %p32 = scmp.eq.s32.totalorder %s31, 0
      %s34 = sadd.s32 %s33, 1
      %s35 = scalar_select %p32, %s33, %s34
      %p38 = pneg %p32
      %p39 = scmp.eq.s32.totalorder %s23, 1
      %p40 = por %p38, %p39
      %p41 = scmp.ne.s32.totalorder %s33, %s36
      %p42 = scmp.eq.s32.totalorder %s23, 0
      %p43 = por %p41, %p42
      %p44 = scmp.ne.s32.totalorder %s33, %s36
      %p45 = scmp.eq.s32.totalorder %s28, 1
      %p46 = por %p44, %p45
      %p47 = scmp.ne.s32.totalorder %s36, %s37
      %p48 = scmp.eq.s32.totalorder %s28, 0
      %p49 = por %p47, %p48
      %p50 = scmp.ne.s32.totalorder %s36, %s37
      %p51 = scmp.eq.s32.totalorder %s29, 1
      %p52 = por %p50, %p51
      %p54 = scmp.ne.s32.totalorder %s37, %s53
      %p55 = scmp.eq.s32.totalorder %s29, 0
      %p56 = por %p54, %p55
      %s57 = ssub.s32 %s23, %s30
      %p58 = scmp.eq.s32.totalorder %s57, 0
      %s60 = sadd.s32 %s59, 1
      %s61 = scalar_select %p58, %s59, %s60
      %p64 = pneg %p58
      %p65 = scmp.eq.s32.totalorder %s23, 1
      %p66 = por %p64, %p65
      %p67 = scmp.ne.s32.totalorder %s59, %s62
      %p68 = scmp.eq.s32.totalorder %s23, 0
      %p69 = por %p67, %p68
      %p70 = scmp.ne.s32.totalorder %s59, %s62
      %p71 = scmp.eq.s32.totalorder %s28, 1
      %p72 = por %p70, %p71
      %p73 = scmp.ne.s32.totalorder %s62, %s63
      %p74 = scmp.eq.s32.totalorder %s28, 0
      %p75 = por %p73, %p74
      %p76 = scmp.ne.s32.totalorder %s62, %s63
      %p77 = scmp.eq.s32.totalorder %s29, 1
      %p78 = por %p76, %p77
      %p80 = scmp.ne.s32.totalorder %s63, %s79
      %p81 = scmp.eq.s32.totalorder %s29, 0
      %p82 = por %p80, %p81
      %s84 = sadd.s32 %s83, 1
      %p87 = scmp.eq.s32.totalorder %s23, 1
      %p88 = scmp.ne.s32.totalorder %s83, %s85
      %p89 = scmp.eq.s32.totalorder %s23, 0
      %p90 = por %p88, %p89
      %p91 = scmp.ne.s32.totalorder %s83, %s85
      %p92 = scmp.eq.s32.totalorder %s28, 1
      %p93 = por %p91, %p92
      %p94 = scmp.ne.s32.totalorder %s85, %s86
      %p95 = scmp.eq.s32.totalorder %s28, 0
      %p96 = por %p94, %p95
      %p97 = scmp.ne.s32.totalorder %s85, %s86
      %p98 = scmp.eq.s32.totalorder %s29, 1
      %p99 = por %p97, %p98
      %p101 = scmp.ne.s32.totalorder %s86, %s100
      %p102 = scmp.eq.s32.totalorder %s29, 0
      %p103 = por %p101, %p102
      %s105 = sadd.s32 %s104, 1
      %p108 = scmp.eq.s32.totalorder %s23, 1
      %p109 = scmp.ne.s32.totalorder %s104, %s106
      %p110 = scmp.eq.s32.totalorder %s23, 0
      %p111 = por %p109, %p110
      %p112 = scmp.ne.s32.totalorder %s104, %s106
      %p113 = scmp.eq.s32.totalorder %s28, 1
      %p114 = por %p112, %p113
      %p115 = scmp.ne.s32.totalorder %s106, %s107
      %p116 = scmp.eq.s32.totalorder %s28, 0
      %p117 = por %p115, %p116
      %p118 = scmp.ne.s32.totalorder %s106, %s107
      %p119 = scmp.eq.s32.totalorder %s29, 1
      %p120 = por %p118, %p119
      %p122 = scmp.ne.s32.totalorder %s107, %s121
      %p123 = scmp.eq.s32.totalorder %s29, 0
      %p124 = por %p122, %p123
      %s126 = sadd.s32 %s125, 1
      %p129 = scmp.eq.s32.totalorder %s23, 1
      %p130 = scmp.ne.s32.totalorder %s125, %s127
      %p131 = scmp.eq.s32.totalorder %s23, 0
      %p132 = por %p130, %p131
      %p133 = scmp.ne.s32.totalorder %s125, %s127
      %p134 = scmp.eq.s32.totalorder %s28, 1
      %p135 = por %p133, %p134
      %p136 = scmp.ne.s32.totalorder %s127, %s128
      %p137 = scmp.eq.s32.totalorder %s28, 0
      %p138 = por %p136, %p137
      %p139 = scmp.ne.s32.totalorder %s127, %s128
      %p140 = scmp.eq.s32.totalorder %s29, 1
      %p141 = por %p139, %p140
      %p143 = scmp.ne.s32.totalorder %s128, %s142
      %p144 = scmp.eq.s32.totalorder %s29, 0
      %p145 = por %p143, %p144
      %s147 = sadd.s32 %s146, 1
      %p150 = scmp.eq.s32.totalorder %s23, 1
      %p151 = scmp.ne.s32.totalorder %s146, %s148
      %p152 = scmp.eq.s32.totalorder %s23, 0
      %p153 = por %p151, %p152
      %p154 = scmp.ne.s32.totalorder %s146, %s148
      %p155 = scmp.eq.s32.totalorder %s28, 1
      %p156 = por %p154, %p155
      %p157 = scmp.ne.s32.totalorder %s148, %s149
      %p158 = scmp.eq.s32.totalorder %s28, 0
      %p159 = por %p157, %p158
      %p160 = scmp.ne.s32.totalorder %s148, %s149
      %p161 = scmp.eq.s32.totalorder %s29, 1
      %p162 = por %p160, %p161
      %p164 = scmp.ne.s32.totalorder %s149, %s163
      %p165 = scmp.eq.s32.totalorder %s29, 0
      %p166 = por %p164, %p165
      %s168 = sadd.s32 %s167, 1
      %p171 = scmp.eq.s32.totalorder %s23, 1
      %p172 = scmp.ne.s32.totalorder %s167, %s169
      %p173 = scmp.eq.s32.totalorder %s23, 0
      %p174 = por %p172, %p173
      %p175 = scmp.ne.s32.totalorder %s167, %s169
      %p176 = scmp.eq.s32.totalorder %s28, 1
      %p177 = por %p175, %p176
      %p178 = scmp.ne.s32.totalorder %s169, %s170
      %p179 = scmp.eq.s32.totalorder %s28, 0
      %p180 = por %p178, %p179
      %p181 = scmp.ne.s32.totalorder %s169, %s170
      %p182 = scmp.eq.s32.totalorder %s29, 1
      %p183 = por %p181, %p182
      %p185 = scmp.ne.s32.totalorder %s170, %s184
      %p186 = scmp.eq.s32.totalorder %s29, 0
      %p187 = por %p185, %p186
      %s189 = sadd.s32 %s188, 1
      %p192 = scmp.eq.s32.totalorder %s23, 1
      %p193 = scmp.ne.s32.totalorder %s188, %s190
      %p194 = scmp.eq.s32.totalorder %s23, 0
      %p195 = por %p193, %p194
      %p196 = scmp.ne.s32.totalorder %s188, %s190
      %p197 = scmp.eq.s32.totalorder %s28, 1
      %p198 = por %p196, %p197
      %p199 = scmp.ne.s32.totalorder %s190, %s191
      %p200 = scmp.eq.s32.totalorder %s28, 0
      %p201 = por %p199, %p200
      %p202 = scmp.ne.s32.totalorder %s190, %s191
      %p203 = scmp.eq.s32.totalorder %s29, 1
      %p204 = por %p202, %p203
      %p206 = scmp.ne.s32.totalorder %s191, %s205
      %p207 = scmp.eq.s32.totalorder %s29, 0
      %p208 = por %p206, %p207
      %s210 = sadd.s32 %s209, 1
      %p213 = scmp.eq.s32.totalorder %s23, 1
      %p214 = scmp.ne.s32.totalorder %s209, %s211
      %p215 = scmp.eq.s32.totalorder %s23, 0
      %p216 = por %p214, %p215
      %p217 = scmp.ne.s32.totalorder %s209, %s211
      %p218 = scmp.eq.s32.totalorder %s28, 1
      %p219 = por %p217, %p218
      %p220 = scmp.ne.s32.totalorder %s211, %s212
      %p221 = scmp.eq.s32.totalorder %s28, 0
      %p222 = por %p220, %p221
      %p223 = scmp.ne.s32.totalorder %s211, %s212
      %p224 = scmp.eq.s32.totalorder %s29, 1
      %p225 = por %p223, %p224
      %p227 = scmp.ne.s32.totalorder %s212, %s226
      %p228 = scmp.eq.s32.totalorder %s29, 0
      %p229 = por %p227, %p228
      %s231 = sadd.s32 %s230, 1
      %p234 = scmp.eq.s32.totalorder %s23, 1
      %p235 = scmp.ne.s32.totalorder %s230, %s232
      %p236 = scmp.eq.s32.totalorder %s23, 0
      %p237 = por %p235, %p236
      %p238 = scmp.ne.s32.totalorder %s230, %s232
      %p239 = scmp.eq.s32.totalorder %s28, 1
      %p240 = por %p238, %p239
      %p241 = scmp.ne.s32.totalorder %s232, %s233
      %p242 = scmp.eq.s32.totalorder %s28, 0
      %p243 = por %p241, %p242
      %p244 = scmp.ne.s32.totalorder %s232, %s233
      %p245 = scmp.eq.s32.totalorder %s29, 1
      %p246 = por %p244, %p245
      %p248 = scmp.ne.s32.totalorder %s233, %s247
      %p249 = scmp.eq.s32.totalorder %s29, 0
      %p250 = por %p248, %p249
      %s252 = sadd.s32 %s251, 1
      %p255 = scmp.eq.s32.totalorder %s23, 1
      %p256 = scmp.ne.s32.totalorder %s251, %s253
      %p257 = scmp.eq.s32.totalorder %s23, 0
      %p258 = por %p256, %p257
      %p259 = scmp.ne.s32.totalorder %s251, %s253
      %p260 = scmp.eq.s32.totalorder %s28, 1
      %p261 = por %p259, %p260
      %p262 = scmp.ne.s32.totalorder %s253, %s254
      %p263 = scmp.eq.s32.totalorder %s28, 0
      %p264 = por %p262, %p263
      %p265 = scmp.ne.s32.totalorder %s253, %s254
      %p266 = scmp.eq.s32.totalorder %s29, 1
      %p267 = por %p265, %p266
      %p269 = scmp.ne.s32.totalorder %s254, %s268
      %p270 = scmp.eq.s32.totalorder %s29, 0
      %p271 = por %p269, %p270
      %s273 = sadd.s32 %s272, 1
      %p276 = scmp.eq.s32.totalorder %s23, 1
      %p277 = scmp.ne.s32.totalorder %s272, %s274
      %p278 = scmp.eq.s32.totalorder %s23, 0
      %p279 = por %p277, %p278
      %p280 = scmp.ne.s32.totalorder %s272, %s274
      %p281 = scmp.eq.s32.totalorder %s28, 1
      %p282 = por %p280, %p281
      %p283 = scmp.ne.s32.totalorder %s274, %s275
      %p284 = scmp.eq.s32.totalorder %s28, 0
      %p285 = por %p283, %p284
      %p286 = scmp.ne.s32.totalorder %s274, %s275
      %p287 = scmp.eq.s32.totalorder %s29, 1
      %p288 = por %p286, %p287
      %p290 = scmp.ne.s32.totalorder %s275, %s289
      %p291 = scmp.eq.s32.totalorder %s29, 0
      %p292 = por %p290, %p291
      %s294 = sadd.s32 %s293, 1
      %p297 = scmp.eq.s32.totalorder %s23, 1
      %p298 = scmp.ne.s32.totalorder %s293, %s295
      %p299 = scmp.eq.s32.totalorder %s23, 0
      %p300 = por %p298, %p299
      %p301 = scmp.ne.s32.totalorder %s293, %s295
      %p302 = scmp.eq.s32.totalorder %s28, 1
      %p303 = por %p301, %p302
      %p304 = scmp.ne.s32.totalorder %s295, %s296
      %p305 = scmp.eq.s32.totalorder %s28, 0
      %p306 = por %p304, %p305
      %p307 = scmp.ne.s32.totalorder %s295, %s296
      %p308 = scmp.eq.s32.totalorder %s29, 1
      %p309 = por %p307, %p308
      %p311 = scmp.ne.s32.totalorder %s296, %s310
      %p312 = scmp.eq.s32.totalorder %s29, 0
      %p313 = por %p311, %p312
      %s314 = ssub.s32 %s23, %s30
      %p315 = scmp.eq.s32.totalorder %s314, 0
      %s317 = sadd.s32 %s316, 1
      %s318 = scalar_select %p315, %s316, %s317
      %p321 = pneg %p315
      %p322 = scmp.eq.s32.totalorder %s23, 1
      %p323 = por %p321, %p322
      %p324 = scmp.ne.s32.totalorder %s316, %s319
      %p325 = scmp.eq.s32.totalorder %s23, 0
      %p326 = por %p324, %p325
      %p327 = scmp.ne.s32.totalorder %s316, %s319
      %p328 = scmp.eq.s32.totalorder %s28, 1
      %p329 = por %p327, %p328
      %p330 = scmp.ne.s32.totalorder %s319, %s320
      %p331 = scmp.eq.s32.totalorder %s28, 0
      %p332 = por %p330, %p331
      %p333 = scmp.ne.s32.totalorder %s319, %s320
      %p334 = scmp.eq.s32.totalorder %s29, 1
      %p335 = por %p333, %p334
      %p337 = scmp.ne.s32.totalorder %s320, %s336
      %p338 = scmp.eq.s32.totalorder %s29, 0
      %p339 = por %p337, %p338
      %s340 = ssub.s32 %s23, %s30
      %p341 = scmp.eq.s32.totalorder %s340, 0
      %s343 = sadd.s32 %s342, 1
      %s344 = scalar_select %p341, %s342, %s343
      %p347 = pneg %p341
      %p348 = scmp.eq.s32.totalorder %s23, 1
      %p349 = por %p347, %p348
      %p350 = scmp.ne.s32.totalorder %s342, %s345
      %p351 = scmp.eq.s32.totalorder %s23, 0
      %p352 = por %p350, %p351
      %p353 = scmp.ne.s32.totalorder %s342, %s345
      %p354 = scmp.eq.s32.totalorder %s28, 1
      %p355 = por %p353, %p354
      %p356 = scmp.ne.s32.totalorder %s345, %s346
      %p357 = scmp.eq.s32.totalorder %s28, 0
      %p358 = por %p356, %p357
      %p359 = scmp.ne.s32.totalorder %s345, %s346
      %p360 = scmp.eq.s32.totalorder %s29, 1
      %p361 = por %p359, %p360
      %p363 = scmp.ne.s32.totalorder %s346, %s362
      %p364 = scmp.eq.s32.totalorder %s29, 0
      %p365 = por %p363, %p364
      %p366 = scmp.le.s32.totalorder 1, %s23
      %p367 = scmp.lt.s32.totalorder %s23, 3
      %p368 = pnand %p366, %p367
      %p369 = pneg %p368
      // Predicated region
      $region9: #{tpu_custom_call.1} parent=5 // pred_check
        _
      $region10: #{tpu_custom_call.1} parent=5 // pred_check_branch
        %371 = sbr.rel (%p368) target = $region12
      $region11: #{tpu_custom_call.1} parent=5 // pred_region
        %s372 = ssub.s32 %s23, 1
        // Predicated region
        $region13: #{tpu_custom_call.1} parent=11 // pred_check
          %p373 = pneg %p96
        $region14: #{tpu_custom_call.1} parent=11 // pred_check_branch
          %375 = sbr.rel (%p373) target = $region16
        $region15: #{tpu_custom_call.1} parent=11 // pred_region
          _
        $region16: #{tpu_custom_call.1} parent=11 // pred_fallthru
          _
        // Predicated region
        $region17: #{tpu_custom_call.1} parent=11 // pred_check
          %p376 = pneg %p117
        $region18: #{tpu_custom_call.1} parent=11 // pred_check_branch
          %378 = sbr.rel (%p376) target = $region20
        $region19: #{tpu_custom_call.1} parent=11 // pred_region
          _
        $region20: #{tpu_custom_call.1} parent=11 // pred_fallthru
          _
        // Predicated region
        $region21: #{tpu_custom_call.1} parent=11 // pred_check
          %p379 = pneg %p138
        $region22: #{tpu_custom_call.1} parent=11 // pred_check_branch
          %381 = sbr.rel (%p379) target = $region24
        $region23: #{tpu_custom_call.1} parent=11 // pred_region
          _
        $region24: #{tpu_custom_call.1} parent=11 // pred_fallthru
          _
        // Predicated region
        $region25: #{tpu_custom_call.1} parent=11 // pred_check
          %p382 = pneg %p159
        $region26: #{tpu_custom_call.1} parent=11 // pred_check_branch
          %384 = sbr.rel (%p382) target = $region28
        $region27: #{tpu_custom_call.1} parent=11 // pred_region
          _
        $region28: #{tpu_custom_call.1} parent=11 // pred_fallthru
          _
        // Predicated region
        $region29: #{tpu_custom_call.1} parent=11 // pred_check
          %p385 = pneg %p180
        $region30: #{tpu_custom_call.1} parent=11 // pred_check_branch
          %387 = sbr.rel (%p385) target = $region32
        $region31: #{tpu_custom_call.1} parent=11 // pred_region
          _
        $region32: #{tpu_custom_call.1} parent=11 // pred_fallthru
          _
        // Predicated region
        $region33: #{tpu_custom_call.1} parent=11 // pred_check
          %p388 = pneg %p201
        $region34: #{tpu_custom_call.1} parent=11 // pred_check_branch
          %390 = sbr.rel (%p388) target = $region36
        $region35: #{tpu_custom_call.1} parent=11 // pred_region
          _
        $region36: #{tpu_custom_call.1} parent=11 // pred_fallthru
          _
        // Predicated region
        $region37: #{tpu_custom_call.1} parent=11 // pred_check
          %p391 = pneg %p222
        $region38: #{tpu_custom_call.1} parent=11 // pred_check_branch
          %393 = sbr.rel (%p391) target = $region40
        $region39: #{tpu_custom_call.1} parent=11 // pred_region
          _
        $region40: #{tpu_custom_call.1} parent=11 // pred_fallthru
          _
        // Predicated region
        $region41: #{tpu_custom_call.1} parent=11 // pred_check
          %p394 = pneg %p243
        $region42: #{tpu_custom_call.1} parent=11 // pred_check_branch
          %396 = sbr.rel (%p394) target = $region44
        $region43: #{tpu_custom_call.1} parent=11 // pred_region
          _
        $region44: #{tpu_custom_call.1} parent=11 // pred_fallthru
          _
        // Predicated region
        $region45: #{tpu_custom_call.1} parent=11 // pred_check
          %p397 = pneg %p264
        $region46: #{tpu_custom_call.1} parent=11 // pred_check_branch
          %399 = sbr.rel (%p397) target = $region48
        $region47: #{tpu_custom_call.1} parent=11 // pred_region
          _
        $region48: #{tpu_custom_call.1} parent=11 // pred_fallthru
          _
        // Predicated region
        $region49: #{tpu_custom_call.1} parent=11 // pred_check
          %p400 = pneg %p285
        $region50: #{tpu_custom_call.1} parent=11 // pred_check_branch
          %402 = sbr.rel (%p400) target = $region52
        $region51: #{tpu_custom_call.1} parent=11 // pred_region
          _
        $region52: #{tpu_custom_call.1} parent=11 // pred_fallthru
          _
        // Predicated region
        $region53: #{tpu_custom_call.1} parent=11 // pred_check
          %p403 = pneg %p306
        $region54: #{tpu_custom_call.1} parent=11 // pred_check_branch
          %405 = sbr.rel (%p403) target = $region56
        $region55: #{tpu_custom_call.1} parent=11 // pred_region
          _
        $region56: #{tpu_custom_call.1} parent=11 // pred_fallthru
          _
      $region12: #{tpu_custom_call.1} parent=5 // pred_fallthru
        _
      %p406 = scmp.lt.s32.totalorder %s23, 2
      // Predicated region
      $region57: #{tpu_custom_call.1} parent=5 // pred_check
        %p407 = pneg %p406
      $region58: #{tpu_custom_call.1} parent=5 // pred_check_branch
        %409 = sbr.rel (%p407) target = $region60
      $region59: #{tpu_custom_call.1} parent=5 // pred_region
        // Predicated region
        $region61: #{tpu_custom_call.1} parent=59 // pred_check
          %p410 = pneg %p43
        $region62: #{tpu_custom_call.1} parent=59 // pred_check_branch
          %412 = sbr.rel (%p410) target = $region64
        $region63: #{tpu_custom_call.1} parent=59 // pred_region
          %p413 = scmp.lt.s32.totalorder %s23, 1
          %s414 = scalar_select %p413, %s23, 1
          %s415 = smul.addr %s414, 2
          %s416 = smul.addr %s415, 8
          %s417 = scalar_lea.vmem %s0, %s416
        $region64: #{tpu_custom_call.1} parent=59 // pred_fallthru
          _
        // Predicated region
        $region65: #{tpu_custom_call.1} parent=59 // pred_check
          %p418 = pneg %p69
        $region66: #{tpu_custom_call.1} parent=59 // pred_check_branch
          %420 = sbr.rel (%p418) target = $region68
        $region67: #{tpu_custom_call.1} parent=59 // pred_region
          %p421 = scmp.lt.s32.totalorder %s23, 1
          %s422 = scalar_select %p421, %s23, 1
          %s423 = smul.addr %s422, 2
          %s424 = scalar_lea.vmem %s1, %s423
        $region68: #{tpu_custom_call.1} parent=59 // pred_fallthru
          _
        // Predicated region
        $region69: #{tpu_custom_call.1} parent=59 // pred_check
          %p425 = pneg %p326
        $region70: #{tpu_custom_call.1} parent=59 // pred_check_branch
          %427 = sbr.rel (%p425) target = $region72
        $region71: #{tpu_custom_call.1} parent=59 // pred_region
          %p428 = scmp.lt.s32.totalorder %s23, 1
          %s429 = scalar_select %p428, %s23, 1
          %s430 = scalar_lea.vmem %s13, %s429
        $region72: #{tpu_custom_call.1} parent=59 // pred_fallthru
          _
      $region60: #{tpu_custom_call.1} parent=5 // pred_fallthru
        _
      %p431 = scmp.le.s32.totalorder 1, %s23
      %p432 = scmp.lt.s32.totalorder %s23, 3
      %p433 = pnand %p431, %p432
      %p434 = pneg %p433
      // Predicated region
      $region73: #{tpu_custom_call.1} parent=5 // pred_check
        _
      $region74: #{tpu_custom_call.1} parent=5 // pred_check_branch
        %436 = sbr.rel (%p433) target = $region76
      $region75: #{tpu_custom_call.1} parent=5 // pred_region
        %s437 = ssub.s32 %s23, 1
        %p438 = scmp.lt.s32.totalorder %s28, 1
        %s439 = scalar_select %p438, %s28, 1
        %s440 = smul.addr %s439, 2
        %s441 = smul.addr %s440, 8
        %s442 = scalar_lea.vmem %s0, %s441
        %p443 = pneg %p49
        %p444 = pneg %p46
        %p445 = scmp.lt.s32.totalorder %s28, 1
        %s446 = scalar_select %p445, %s28, 1
        %s447 = smul.addr %s446, 2
        %s448 = scalar_lea.vmem %s1, %s447
        %p449 = pneg %p75
        %p450 = pneg %p72
        %p451 = pneg %p96
        %p452 = pneg %p93
        %p453 = pneg %p117
        %p454 = pneg %p114
        %p455 = pneg %p138
        %p456 = pneg %p135
        %p457 = pneg %p159
        %p458 = pneg %p156
        %p459 = pneg %p180
        %p460 = pneg %p177
        %p461 = pneg %p201
        %p462 = pneg %p198
        %p463 = pneg %p222
        %p464 = pneg %p219
        %p465 = pneg %p243
        %p466 = pneg %p240
        %p467 = pneg %p264
        %p468 = pneg %p261
        %p469 = pneg %p285
        %p470 = pneg %p282
        %p471 = pneg %p306
        %p472 = pneg %p303
        %p473 = scmp.lt.s32.totalorder %s28, 1
        %s474 = scalar_select %p473, %s28, 1
        %s475 = scalar_lea.vmem %s13, %s474
        %p476 = pneg %p332
        %p477 = pneg %p329
        %p478 = pneg %p358
        %p479 = pneg %p355
        %s480 = sand.u32 %s345, 1
        %s481 = scalar_lea.sflag [#allocation4], %s480
        %s482 = sand.u32 %s345, 1
        %s483 = scalar_lea.vmem [#allocation3], %s482
        %p484 = scmp.lt.s32.totalorder %s28, 1
        %s485 = scalar_select %p484, %s28, 1
        %s486 = smul.addr %s485, 2
        %s487 = smul.addr %s486, 8
        %s488 = scalar_lea.vmem %s0, %s487
        %p489 = scmp.lt.s32.totalorder %s28, 1
        %s490 = scalar_select %p489, %s28, 1
        %s491 = smul.addr %s490, 2
        %s492 = scalar_lea.vmem %s1, %s491
        %p493 = scmp.lt.s32.totalorder %s28, 1
        %s494 = scalar_select %p493, %s28, 1
        %s495 = scalar_lea.vmem %s13, %s494
        %v496 = vld [vmem:[%s488] sm:$0xff]
        %v497 = vld [vmem:[%s488 + $0x8] sm:$0xff]
        %498 = vst [vmem:[#allocation2] sm:$0xff] 0.0
        %499 = vst [vmem:[#allocation2 + $0x8] sm:$0xff] 0.0
        %500 = vst [vmem:[#allocation2 + $0x10] sm:$0xff] 0.0
        %501 = vst [vmem:[#allocation2 + $0x18] sm:$0xff] 0.0
        %502 = vst [vmem:[#allocation2 + $0x20] sm:$0xff] 0.0
        %503 = vst [vmem:[#allocation2 + $0x28] sm:$0xff] 0.0
        %vm506 = vcmask 1040384
        %v507 = vrot.slane %v496, 7
        %v508 = vrot.slane %v497, 7
        %v509 = vsel %vm506, %v507, %v508
        %512 = vst [vmem:[#allocation2] sm:$0xfe] %v507
        %513 = vst [vmem:[#allocation2 + $0x18] sm:$0xff] %v509
        %514 = vst [vmem:[#allocation2 + $0x8] sm:$0xff] %v496
        %515 = vst [vmem:[#allocation2 + $0x20] sm:$0xff] %v497
        %vm516 = vcmask 1046528
        %v517 = vrot.slane %v496, 1
        %v518 = vrot.slane %v497, 1
        %v519 = vsel %vm516, %v517, %v518
        %522 = vst [vmem:[#allocation2 + $0x10] sm:$0xff] %v519
        %523 = vst [vmem:[#allocation2 + $0x28] sm:$0x7f] %v518
        %v524 = vld [vmem:[#allocation2] sm:$0xff]
        %v525 = vld [vmem:[#allocation2 + $0x8] sm:$0xff]
        %v526 = vld [vmem:[#allocation2 + $0x10] sm:$0xff]
        %v527 = vld [vmem:[#allocation2 + $0x18] sm:$0xff]
        %v528 = vld [vmem:[#allocation2 + $0x20] sm:$0xff]
        %v529 = vld [vmem:[#allocation2 + $0x28] sm:$0xff]
        %v530 = vld [vmem:[%s2] sm:$0xff]
        %v531 = vld [vmem:[%s2 + $0x8] sm:$0xff]
        %v532 = vld [vmem:[%s2 + $0x10] sm:$0xff]
        %v533 = vld [vmem:[%s2 + $0x18] sm:$0xff]
        %v534 = vld [vmem:[%s2 + $0x20] sm:$0xff]
        %v535 = vld [vmem:[%s2 + $0x28] sm:$0xff]
        %v536 = vld [vmem:[%s2 + $0x30] sm:$0xff]
        %v537 = vld [vmem:[%s2 + $0x38] sm:$0xff]
        %v538 = vld [vmem:[%s2 + $0x40] sm:$0xff]
        %v539 = vld [vmem:[%s2 + $0x48] sm:$0xff]
        %v540 = vld [vmem:[%s2 + $0x50] sm:$0xff]
        %v541 = vld [vmem:[%s2 + $0x58] sm:$0xff]
        %v542 = vld [vmem:[%s2 + $0x60] sm:$0xff]
        %v543 = vld [vmem:[%s2 + $0x68] sm:$0xff]
        %v544 = vld [vmem:[%s2 + $0x70] sm:$0xff]
        %v545 = vld [vmem:[%s2 + $0x78] sm:$0xff]
        %v546 = vld [vmem:[%s2 + $0x80] sm:$0xff]
        %v547 = vld [vmem:[%s2 + $0x88] sm:$0xff]
        %v548 = vld [vmem:[%s2 + $0x90] sm:$0xff]
        %v549 = vld [vmem:[%s2 + $0x98] sm:$0xff]
        %v550 = vld [vmem:[%s2 + $0xa0] sm:$0xff]
        %v551 = vld [vmem:[%s2 + $0xa8] sm:$0xff]
        %v552 = vld [vmem:[%s2 + $0xb0] sm:$0xff]
        %v553 = vld [vmem:[%s2 + $0xb8] sm:$0xff]
        %v554 = vld [vmem:[%s2 + $0xc0] sm:$0xff]
        %v555 = vld [vmem:[%s2 + $0xc8] sm:$0xff]
        %v556 = vld [vmem:[%s2 + $0xd0] sm:$0xff]
        %v557 = vld [vmem:[%s2 + $0xd8] sm:$0xff]
        %v558 = vld [vmem:[%s2 + $0xe0] sm:$0xff]
        %v559 = vld [vmem:[%s2 + $0xe8] sm:$0xff]
        %v560 = vld [vmem:[%s2 + $0xf0] sm:$0xff]
        %v561 = vld [vmem:[%s2 + $0xf8] sm:$0xff]
        %v562 = vld [vmem:[%s2 + $0x100] sm:$0xff]
        %v563 = vld [vmem:[%s2 + $0x108] sm:$0xff]
        %v564 = vld [vmem:[%s2 + $0x110] sm:$0xff]
        %v565 = vld [vmem:[%s2 + $0x118] sm:$0xff]
        %v566 = vld [vmem:[%s2 + $0x120] sm:$0xff]
        %v567 = vld [vmem:[%s2 + $0x128] sm:$0xff]
        %v568 = vld [vmem:[%s2 + $0x130] sm:$0xff]
        %v569 = vld [vmem:[%s2 + $0x138] sm:$0xff]
        %v570 = vld [vmem:[%s2 + $0x140] sm:$0xff]
        %v571 = vld [vmem:[%s2 + $0x148] sm:$0xff]
        %v572 = vld [vmem:[%s2 + $0x150] sm:$0xff]
        %v573 = vld [vmem:[%s2 + $0x158] sm:$0xff]
        %v574 = vld [vmem:[%s2 + $0x160] sm:$0xff]
        %v575 = vld [vmem:[%s2 + $0x168] sm:$0xff]
        %v576 = vld [vmem:[%s2 + $0x170] sm:$0xff]
        %v577 = vld [vmem:[%s2 + $0x178] sm:$0xff]
        %v578 = vld [vmem:[%s3] sm:$0x1]
        %v580 = vlaneseq
        %v581 = vshrl.u32 %v580, 7
        %v582 = vsub.s32 0, %v581
        %v583 = vrot.slane %v578, %v582
        %585 = vmatprep.subr.mxu0 0.0
        %586 = vmatpush1.msra.mxu0 %v530
        %587 = vmatprep.subr.mxu0 0.0
        %588 = vmatpush1.msra.mxu0 %v531
        %589 = vmatprep.subr.mxu0 0.0
        %590 = vmatpush1.msra.mxu0 %v532
        %591 = vmatprep.subr.mxu0 0.0
        %592 = vmatpush1.msra.mxu0 %v533
        %593 = vmatprep.subr.mxu0 0.0
        %594 = vmatpush1.msra.mxu0 %v534
        %595 = vmatprep.subr.mxu0 0.0
        %596 = vmatpush1.msra.mxu0 %v535
        %597 = vmatprep.subr.mxu0 0.0
        %598 = vmatpush1.msra.mxu0 %v536
        %599 = vmatprep.subr.mxu0 0.0
        %600 = vmatpush1.msra.mxu0 %v537
        %601 = vmatprep.subr.mxu0 0.0
        %602 = vmatpush1.msra.mxu0 %v538
        %603 = vmatprep.subr.mxu0 0.0
        %604 = vmatpush1.msra.mxu0 %v539
        %605 = vmatprep.subr.mxu0 0.0
        %606 = vmatpush1.msra.mxu0 %v540
        %607 = vmatprep.subr.mxu0 0.0
        %608 = vmatpush1.msra.mxu0 %v541
        %609 = vmatprep.subr.mxu0 0.0
        %610 = vmatpush1.msra.mxu0 %v542
        %611 = vmatprep.subr.mxu0 0.0
        %612 = vmatpush1.msra.mxu0 %v543
        %613 = vmatprep.subr.mxu0 0.0
        %614 = vmatpush1.msra.mxu0 %v544
        %615 = vmatprep.subr.mxu0 0.0
        %616 = vmatpush1.msra.mxu0 %v545
        %617 = vmatprep.subr.mxu0 0.0
        %618 = vmatpush1.msra.mxu0 %v546
        %619 = vmatprep.subr.mxu0 0.0
        %620 = vmatpush1.msra.mxu0 %v547
        %621 = vmatprep.subr.mxu0 0.0
        %622 = vmatpush1.msra.mxu0 %v548
        %623 = vmatprep.subr.mxu0 0.0
        %624 = vmatpush1.msra.mxu0 %v549
        %625 = vmatprep.subr.mxu0 0.0
        %626 = vmatpush1.msra.mxu0 %v550
        %627 = vmatprep.subr.mxu0 0.0
        %628 = vmatpush1.msra.mxu0 %v551
        %629 = vmatprep.subr.mxu0 0.0
        %630 = vmatpush1.msra.mxu0 %v552
        %631 = vmatprep.subr.mxu0 0.0
        %632 = vmatpush1.msra.mxu0 %v553
        %633 = vmatprep.subr.mxu0 0.0
        %634 = vmatpush1.msra.mxu0 %v554
        %635 = vmatprep.subr.mxu0 0.0
        %636 = vmatpush1.msra.mxu0 %v555
        %637 = vmatprep.subr.mxu0 0.0
        %638 = vmatpush1.msra.mxu0 %v556
        %639 = vmatprep.subr.mxu0 0.0
        %640 = vmatpush1.msra.mxu0 %v557
        %641 = vmatprep.subr.mxu0 0.0
        %642 = vmatpush1.msra.mxu0 %v558
        %643 = vmatprep.subr.mxu0 0.0
        %644 = vmatpush1.msra.mxu0 %v559
        %645 = vmatprep.subr.mxu0 0.0
        %646 = vmatpush1.msra.mxu0 %v560
        %647 = vmatprep.subr.mxu0 0.0
        %648 = vmatpush1.msra.mxu0 %v561
        %649 = vmatprep.mubr.f32.mxu0 %v525
        %650 = vmatmul.mubr.f32.gmra.mrb[0].mxu0 %v524
        %v651 = vpop.f32.mrb[0].mxu0
        %v652 = vadd.f32 %v583, %v651
        %v653 = vpop.f32.mrb[0].mxu0
        %654 = vmatprep.mubr.f32.mxu0 %v528
        %655 = vmatmul.mubr.f32.gmra.mrb[0].mxu0 %v527
        %v656 = vpop.f32.mrb[0].mxu0
        %v657 = vadd.f32 %v583, %v656
        %v658 = vpop.f32.mrb[0].mxu0
        %659 = vdwg.mxu0
        %660 = vmatprep.subr.mxu0 0.0
        %661 = vmatpush1.msra.mxu0 %v562
        %662 = vmatprep.subr.mxu0 0.0
        %663 = vmatpush1.msra.mxu0 %v563
        %664 = vmatprep.subr.mxu0 0.0
        %665 = vmatpush1.msra.mxu0 %v564
        %666 = vmatprep.subr.mxu0 0.0
        %667 = vmatpush1.msra.mxu0 %v565
        %668 = vmatprep.subr.mxu0 0.0
        %669 = vmatpush1.msra.mxu0 %v566
        %670 = vmatprep.subr.mxu0 0.0
        %671 = vmatpush1.msra.mxu0 %v567
        %672 = vmatprep.subr.mxu0 0.0
        %673 = vmatpush1.msra.mxu0 %v568
        %674 = vmatprep.subr.mxu0 0.0
        %675 = vmatpush1.msra.mxu0 %v569
        %676 = vmatprep.subr.mxu0 0.0
        %677 = vmatpush1.msra.mxu0 %v570
        %678 = vmatprep.subr.mxu0 0.0
        %679 = vmatpush1.msra.mxu0 %v571
        %680 = vmatprep.subr.mxu0 0.0
        %681 = vmatpush1.msra.mxu0 %v572
        %682 = vmatprep.subr.mxu0 0.0
        %683 = vmatpush1.msra.mxu0 %v573
        %684 = vmatprep.subr.mxu0 0.0
        %685 = vmatpush1.msra.mxu0 %v574
        %686 = vmatprep.subr.mxu0 0.0
        %687 = vmatpush1.msra.mxu0 %v575
        %688 = vmatprep.subr.mxu0 0.0
        %689 = vmatpush1.msra.mxu0 %v576
        %690 = vmatprep.subr.mxu0 0.0
        %691 = vmatpush1.msra.mxu0 %v577
        %692 = vmatprep.subr.mxu0 0.0
        %693 = vmatpush1.msra.mxu0 0.0
        %694 = vmatprep.subr.mxu0 0.0
        %695 = vmatpush1.msra.mxu0 0.0
        %696 = vmatprep.subr.mxu0 0.0
        %697 = vmatpush1.msra.mxu0 0.0
        %698 = vmatprep.subr.mxu0 0.0
        %699 = vmatpush1.msra.mxu0 0.0
        %700 = vmatprep.subr.mxu0 0.0
        %701 = vmatpush1.msra.mxu0 0.0
        %702 = vmatprep.subr.mxu0 0.0
        %703 = vmatpush1.msra.mxu0 0.0
        %704 = vmatprep.subr.mxu0 0.0
        %705 = vmatpush1.msra.mxu0 0.0
        %706 = vmatprep.subr.mxu0 0.0
        %707 = vmatpush1.msra.mxu0 0.0
        %708 = vmatprep.subr.mxu0 0.0
        %709 = vmatpush1.msra.mxu0 0.0
        %710 = vmatprep.subr.mxu0 0.0
        %711 = vmatpush1.msra.mxu0 0.0
        %712 = vmatprep.subr.mxu0 0.0
        %713 = vmatpush1.msra.mxu0 0.0
        %714 = vmatprep.subr.mxu0 0.0
        %715 = vmatpush1.msra.mxu0 0.0
        %716 = vmatprep.subr.mxu0 0.0
        %717 = vmatpush1.msra.mxu0 0.0
        %718 = vmatprep.subr.mxu0 0.0
        %719 = vmatpush1.msra.mxu0 0.0
        %720 = vmatprep.subr.mxu0 0.0
        %721 = vmatpush1.msra.mxu0 0.0
        %722 = vmatprep.subr.mxu0 0.0
        %723 = vmatpush1.msra.mxu0 0.0
        %724 = vmatprep.mubr.f32.mxu0 0.0
        %725 = vmatmul.mubr.f32.gmra.mrb[0].mxu0 %v526
        %v726 = vpop.f32.mrb[0].mxu0
        %v727 = vadd.f32 %v652, %v726
        %v728 = vpop.f32.mrb[0].mxu0
        %729 = vmatprep.mubr.f32.mxu0 0.0
        %730 = vmatmul.mubr.f32.gmra.mrb[0].mxu0 %v529
        %v731 = vpop.f32.mrb[0].mxu0
        %v732 = vadd.f32 %v657, %v731
        %v733 = vpop.f32.mrb[0].mxu0
        %734 = vdwg.mxu0
        %v735 = vld [vmem:[%s492] sm:$0x3]
        %v736 = vlaneseq
        %v737 = vshrl.u32 %v736, 7
        %v738 = vadd.s32 %v737, 8
        %v739 = vlaneseq
        %v740 = vshrl.u32 %v739, 7
        %v741 = vsub.s32 0, %v740
        %v742 = vrot.slane %v735, %v741
        %vm743 = vcmp.ge.s32.totalorder %v737, %v742
        %vm744 = vcmp.ge.s32.totalorder %v738, %v742
        %v745 = vlaneseq
        %v746 = vshrl.u32 %v745, 7
        %v747 = vsub.s32 1, %v746
        %v748 = vrot.slane %v735, %v747
        %vm749 = vcmp.le.s32.totalorder %v737, %v748
        %vm750 = vcmp.le.s32.totalorder %v738, %v748
        %vm751 = vmand %vm743, %vm749
        %vm752 = vmand %vm744, %vm750
        %754 = vset.pattern.permute.xlu0 64
        %755 = vperm.xlu0 %754, %v727
        %v756 = vpop.permute.xlu0 %755
        %759 = vset.pattern.permute.xlu0 64
        %760 = vperm.xlu0 %759, %v732
        %v761 = vpop.permute.xlu0 %760
        %v763 = vsel %vm751, %v756, -1e+30
        %v764 = vsel %vm752, %v761, -1e+30
        %vm765 = vcmask 23552
        %v766 = vsel %vm765, %v763, -inf
        %v767 = vsel %vm765, %v764, -inf
        %v768 = vmax.f32 %v766, %v767
        %v769 = vrot.slane %v768, 4
        %v770 = vmax.f32 %v768, %v769
        %v771 = vrot.slane %v770, 2
        %v772 = vmax.f32 %v770, %v771
        %v773 = vrot.slane %v772, 1
        %v774 = vmax.f32 %v772, %v773
        %v775 = vsub.f32 %v763, %v774
        %v776 = vsub.f32 %v764, %v774
        %v777 = vmul.f32 %v775, 1.442695
        %v778 = vpow.pop %v777
        %v779 = vmul.f32 %v776, 1.442695
        %v780 = vpow.pop %v779
        %v781 = vsel %vm751, %v778, 0.0
        %v782 = vsel %vm752, %v780, 0.0
        %v783 = vsel %vm765, %v781, 0.0
        %v784 = vsel %vm765, %v782, 0.0
        %v785 = vadd.f32 %v783, %v784
        %v786 = vrot.slane %v785, 4
        %v787 = vadd.f32 %v785, %v786
        %v788 = vrot.slane %v787, 2
        %v789 = vadd.f32 %v787, %v788
        %v790 = vrot.slane %v789, 1
        %v791 = vadd.f32 %v789, %v790
        %v792 = vadd.f32 %v791, 1e-13
        %v793 = vrcp.pop %v792
        %v794 = vmul.f32 %v781, %v793
        %v795 = vmul.f32 %v782, %v793
        %v796 = vld [vmem:[%s7] sm:$0x1]
        %798 = vset.pattern.permute.xlu0 0
        %799 = vperm.xlu0 %798, %v794
        %v800 = vpop.permute.xlu0 %799
        %803 = vset.pattern.permute.xlu0 0
        %804 = vperm.xlu0 %803, %v795
        %v805 = vpop.permute.xlu0 %804
        %v807 = vmul.f32 %v800, %v727
        %v808 = vmul.f32 %v805, %v732
        %vm809 = vcmask 523264
        %v810 = vsel %vm809, %v807, 0.0
        %v811 = vsel %vm809, %v808, 0.0
        %v812 = vadd.f32 %v810, %v811
        %v813 = vrot.slane %v812, 4
        %v814 = vadd.f32 %v812, %v813
        %v815 = vrot.slane %v814, 2
        %v816 = vadd.f32 %v814, %v815
        %v817 = vrot.slane %v816, 1
        %v818 = vadd.f32 %v816, %v817
        %v819 = vld [vmem:[%s4] sm:$0x1]
        %v820 = vmul.f32 %v818, %v819
        %v821 = vld [vmem:[%s5] sm:$0x1]
        %v822 = vadd.f32 %v820, %v821
        %v823 = vld [vmem:[%s6] sm:$0xff]
        %v824 = vld [vmem:[%s6 + $0x8] sm:$0xff]
        %v825 = vld [vmem:[%s6 + $0x10] sm:$0xff]
        %v826 = vld [vmem:[%s6 + $0x18] sm:$0xff]
        %v827 = vld [vmem:[%s6 + $0x20] sm:$0xff]
        %v828 = vld [vmem:[%s6 + $0x28] sm:$0xff]
        %v829 = vld [vmem:[%s6 + $0x30] sm:$0xff]
        %v830 = vld [vmem:[%s6 + $0x38] sm:$0xff]
        %v832 = vsel %vm809, %v822, 0
        %834 = vmatprep.subr.mxu0 0.0
        %835 = vmatpush1.msra.mxu0 %v823
        %836 = vmatprep.subr.mxu0 0.0
        %837 = vmatpush1.msra.mxu0 %v824
        %838 = vmatprep.subr.mxu0 0.0
        %839 = vmatpush1.msra.mxu0 %v825
        %840 = vmatprep.subr.mxu0 0.0
        %841 = vmatpush1.msra.mxu0 %v826
        %842 = vmatprep.subr.mxu0 0.0
        %843 = vmatpush1.msra.mxu0 %v827
        %844 = vmatprep.subr.mxu0 0.0
        %845 = vmatpush1.msra.mxu0 %v828
        %846 = vmatprep.subr.mxu0 0.0
        %847 = vmatpush1.msra.mxu0 %v829
        %848 = vmatprep.subr.mxu0 0.0
        %849 = vmatpush1.msra.mxu0 %v830
        %850 = vmatprep.subr.mxu0 0.0
        %851 = vmatpush1.msra.mxu0 0.0
        %852 = vmatprep.subr.mxu0 0.0
        %853 = vmatpush1.msra.mxu0 0.0
        %854 = vmatprep.subr.mxu0 0.0
        %855 = vmatpush1.msra.mxu0 0.0
        %856 = vmatprep.subr.mxu0 0.0
        %857 = vmatpush1.msra.mxu0 0.0
        %858 = vmatprep.subr.mxu0 0.0
        %859 = vmatpush1.msra.mxu0 0.0
        %860 = vmatprep.subr.mxu0 0.0
        %861 = vmatpush1.msra.mxu0 0.0
        %862 = vmatprep.subr.mxu0 0.0
        %863 = vmatpush1.msra.mxu0 0.0
        %864 = vmatprep.subr.mxu0 0.0
        %865 = vmatpush1.msra.mxu0 0.0
        %866 = vmatprep.subr.mxu0 0.0
        %867 = vmatpush1.msra.mxu0 0.0
        %868 = vmatprep.subr.mxu0 0.0
        %869 = vmatpush1.msra.mxu0 0.0
        %870 = vmatprep.subr.mxu0 0.0
        %871 = vmatpush1.msra.mxu0 0.0
        %872 = vmatprep.subr.mxu0 0.0
        %873 = vmatpush1.msra.mxu0 0.0
        %874 = vmatprep.subr.mxu0 0.0
        %875 = vmatpush1.msra.mxu0 0.0
        %876 = vmatprep.subr.mxu0 0.0
        %877 = vmatpush1.msra.mxu0 0.0
        %878 = vmatprep.subr.mxu0 0.0
        %879 = vmatpush1.msra.mxu0 0.0
        %880 = vmatprep.subr.mxu0 0.0
        %881 = vmatpush1.msra.mxu0 0.0
        %882 = vmatprep.subr.mxu0 0.0
        %883 = vmatpush1.msra.mxu0 0.0
        %884 = vmatprep.subr.mxu0 0.0
        %885 = vmatpush1.msra.mxu0 0.0
        %886 = vmatprep.subr.mxu0 0.0
        %887 = vmatpush1.msra.mxu0 0.0
        %888 = vmatprep.subr.mxu0 0.0
        %889 = vmatpush1.msra.mxu0 0.0
        %890 = vmatprep.subr.mxu0 0.0
        %891 = vmatpush1.msra.mxu0 0.0
        %892 = vmatprep.subr.mxu0 0.0
        %893 = vmatpush1.msra.mxu0 0.0
        %894 = vmatprep.subr.mxu0 0.0
        %895 = vmatpush1.msra.mxu0 0.0
        %896 = vmatprep.subr.mxu0 0.0
        %897 = vmatpush1.msra.mxu0 0.0
        %898 = vmatprep.mubr.f32.mxu0 0.0
        %899 = vmatmul.mubr.f32.gmra.mrb[0].mxu0 %v832
        %v900 = vpop.f32.mrb[0].mxu0
        %v901 = vadd.f32 0.0, %v900
        %v902 = vpop.f32.mrb[0].mxu0
        %903 = vdwg.mxu0
        %v904 = vadd.f32 %v796, %v901
        %905 = vset.pattern.permute.xlu0 1
        %906 = vperm.xlu0 %905, %v794
        %v907 = vpop.permute.xlu0 %906
        %909 = vset.pattern.permute.xlu0 1
        %910 = vperm.xlu0 %909, %v795
        %v911 = vpop.permute.xlu0 %910
        %v913 = vmul.f32 %v907, %v727
        %v914 = vmul.f32 %v911, %v732
        %v915 = vsel %vm809, %v913, 0.0
        %v916 = vsel %vm809, %v914, 0.0
        %v917 = vadd.f32 %v915, %v916
        %v918 = vrot.slane %v917, 4
        %v919 = vadd.f32 %v917, %v918
        %v920 = vrot.slane %v919, 2
        %v921 = vadd.f32 %v919, %v920
        %v922 = vrot.slane %v921, 1
        %v923 = vadd.f32 %v921, %v922
        %v924 = vld [vmem:[%s4 + $0x1] sm:$0x1]
        %v925 = vmul.f32 %v923, %v924
        %v926 = vld [vmem:[%s5 + $0x1] sm:$0x1]
        %v927 = vadd.f32 %v925, %v926
        %s928 = scalar_lea.vmem %s6, 64
        %v929 = vld [vmem:[%s928] sm:$0xff]
        %v930 = vld [vmem:[%s928 + $0x8] sm:$0xff]
        %v931 = vld [vmem:[%s928 + $0x10] sm:$0xff]
        %v932 = vld [vmem:[%s928 + $0x18] sm:$0xff]
        %v933 = vld [vmem:[%s928 + $0x20] sm:$0xff]
        %v934 = vld [vmem:[%s928 + $0x28] sm:$0xff]
        %v935 = vld [vmem:[%s928 + $0x30] sm:$0xff]
        %v936 = vld [vmem:[%s928 + $0x38] sm:$0xff]
        %v938 = vsel %vm809, %v927, 0
        %940 = vmatprep.subr.mxu0 0.0
        %941 = vmatpush1.msra.mxu0 %v929
        %942 = vmatprep.subr.mxu0 0.0
        %943 = vmatpush1.msra.mxu0 %v930
        %944 = vmatprep.subr.mxu0 0.0
        %945 = vmatpush1.msra.mxu0 %v931
        %946 = vmatprep.subr.mxu0 0.0
        %947 = vmatpush1.msra.mxu0 %v932
        %948 = vmatprep.subr.mxu0 0.0
        %949 = vmatpush1.msra.mxu0 %v933
        %950 = vmatprep.subr.mxu0 0.0
        %951 = vmatpush1.msra.mxu0 %v934
        %952 = vmatprep.subr.mxu0 0.0
        %953 = vmatpush1.msra.mxu0 %v935
        %954 = vmatprep.subr.mxu0 0.0
        %955 = vmatpush1.msra.mxu0 %v936
        %956 = vmatprep.subr.mxu0 0.0
        %957 = vmatpush1.msra.mxu0 0.0
        %958 = vmatprep.subr.mxu0 0.0
        %959 = vmatpush1.msra.mxu0 0.0
        %960 = vmatprep.subr.mxu0 0.0
        %961 = vmatpush1.msra.mxu0 0.0
        %962 = vmatprep.subr.mxu0 0.0
        %963 = vmatpush1.msra.mxu0 0.0
        %964 = vmatprep.subr.mxu0 0.0
        %965 = vmatpush1.msra.mxu0 0.0
        %966 = vmatprep.subr.mxu0 0.0
        %967 = vmatpush1.msra.mxu0 0.0
        %968 = vmatprep.subr.mxu0 0.0
        %969 = vmatpush1.msra.mxu0 0.0
        %970 = vmatprep.subr.mxu0 0.0
        %971 = vmatpush1.msra.mxu0 0.0
        %972 = vmatprep.subr.mxu0 0.0
        %973 = vmatpush1.msra.mxu0 0.0
        %974 = vmatprep.subr.mxu0 0.0
        %975 = vmatpush1.msra.mxu0 0.0
        %976 = vmatprep.subr.mxu0 0.0
        %977 = vmatpush1.msra.mxu0 0.0
        %978 = vmatprep.subr.mxu0 0.0
        %979 = vmatpush1.msra.mxu0 0.0
        %980 = vmatprep.subr.mxu0 0.0
        %981 = vmatpush1.msra.mxu0 0.0
        %982 = vmatprep.subr.mxu0 0.0
        %983 = vmatpush1.msra.mxu0 0.0
        %984 = vmatprep.subr.mxu0 0.0
        %985 = vmatpush1.msra.mxu0 0.0
        %986 = vmatprep.subr.mxu0 0.0
        %987 = vmatpush1.msra.mxu0 0.0
        %988 = vmatprep.subr.mxu0 0.0
        %989 = vmatpush1.msra.mxu0 0.0
        %990 = vmatprep.subr.mxu0 0.0
        %991 = vmatpush1.msra.mxu0 0.0
        %992 = vmatprep.subr.mxu0 0.0
        %993 = vmatpush1.msra.mxu0 0.0
        %994 = vmatprep.subr.mxu0 0.0
        %995 = vmatpush1.msra.mxu0 0.0
        %996 = vmatprep.subr.mxu0 0.0
        %997 = vmatpush1.msra.mxu0 0.0
        %998 = vmatprep.subr.mxu0 0.0
        %999 = vmatpush1.msra.mxu0 0.0
        %1000 = vmatprep.subr.mxu0 0.0
        %1001 = vmatpush1.msra.mxu0 0.0
        %1002 = vmatprep.subr.mxu0 0.0
        %1003 = vmatpush1.msra.mxu0 0.0
        %1004 = vmatprep.mubr.f32.mxu0 0.0
        %1005 = vmatmul.mubr.f32.gmra.mrb[0].mxu0 %v938
        %v1006 = vpop.f32.mrb[0].mxu0
        %v1007 = vadd.f32 0.0, %v1006
        %v1008 = vpop.f32.mrb[0].mxu0
        %1009 = vdwg.mxu0
        %v1010 = vadd.f32 %v904, %v1007
        %1011 = vset.pattern.permute.xlu0 2
        %1012 = vperm.xlu0 %1011, %v794
        %v1013 = vpop.permute.xlu0 %1012
        %1015 = vset.pattern.permute.xlu0 2
        %1016 = vperm.xlu0 %1015, %v795
        %v1017 = vpop.permute.xlu0 %1016
        %v1019 = vmul.f32 %v1013, %v727
        %v1020 = vmul.f32 %v1017, %v732
        %v1021 = vsel %vm809, %v1019, 0.0
        %v1022 = vsel %vm809, %v1020, 0.0
        %v1023 = vadd.f32 %v1021, %v1022
        %v1024 = vrot.slane %v1023, 4
        %v1025 = vadd.f32 %v1023, %v1024
        %v1026 = vrot.slane %v1025, 2
        %v1027 = vadd.f32 %v1025, %v1026
        %v1028 = vrot.slane %v1027, 1
        %v1029 = vadd.f32 %v1027, %v1028
        %v1030 = vld [vmem:[%s4 + $0x2] sm:$0x1]
        %v1031 = vmul.f32 %v1029, %v1030
        %v1032 = vld [vmem:[%s5 + $0x2] sm:$0x1]
        %v1033 = vadd.f32 %v1031, %v1032
        %s1034 = scalar_lea.vmem %s6, 128
        %v1035 = vld [vmem:[%s1034] sm:$0xff]
        %v1036 = vld [vmem:[%s1034 + $0x8] sm:$0xff]
        %v1037 = vld [vmem:[%s1034 + $0x10] sm:$0xff]
        %v1038 = vld [vmem:[%s1034 + $0x18] sm:$0xff]
        %v1039 = vld [vmem:[%s1034 + $0x20] sm:$0xff]
        %v1040 = vld [vmem:[%s1034 + $0x28] sm:$0xff]
        %v1041 = vld [vmem:[%s1034 + $0x30] sm:$0xff]
        %v1042 = vld [vmem:[%s1034 + $0x38] sm:$0xff]
        %v1044 = vsel %vm809, %v1033, 0
        %1046 = vmatprep.subr.mxu0 0.0
        %1047 = vmatpush1.msra.mxu0 %v1035
        %1048 = vmatprep.subr.mxu0 0.0
        %1049 = vmatpush1.msra.mxu0 %v1036
        %1050 = vmatprep.subr.mxu0 0.0
        %1051 = vmatpush1.msra.mxu0 %v1037
        %1052 = vmatprep.subr.mxu0 0.0
        %1053 = vmatpush1.msra.mxu0 %v1038
        %1054 = vmatprep.subr.mxu0 0.0
        %1055 = vmatpush1.msra.mxu0 %v1039
        %1056 = vmatprep.subr.mxu0 0.0
        %1057 = vmatpush1.msra.mxu0 %v1040
        %1058 = vmatprep.subr.mxu0 0.0
        %1059 = vmatpush1.msra.mxu0 %v1041
        %1060 = vmatprep.subr.mxu0 0.0
        %1061 = vmatpush1.msra.mxu0 %v1042
        %1062 = vmatprep.subr.mxu0 0.0
        %1063 = vmatpush1.msra.mxu0 0.0
        %1064 = vmatprep.subr.mxu0 0.0
        %1065 = vmatpush1.msra.mxu0 0.0
        %1066 = vmatprep.subr.mxu0 0.0
        %1067 = vmatpush1.msra.mxu0 0.0
        %1068 = vmatprep.subr.mxu0 0.0
        %1069 = vmatpush1.msra.mxu0 0.0
        %1070 = vmatprep.subr.mxu0 0.0
        %1071 = vmatpush1.msra.mxu0 0.0
        %1072 = vmatprep.subr.mxu0 0.0
        %1073 = vmatpush1.msra.mxu0 0.0
        %1074 = vmatprep.subr.mxu0 0.0
        %1075 = vmatpush1.msra.mxu0 0.0
        %1076 = vmatprep.subr.mxu0 0.0
        %1077 = vmatpush1.msra.mxu0 0.0
        %1078 = vmatprep.subr.mxu0 0.0
        %1079 = vmatpush1.msra.mxu0 0.0
        %1080 = vmatprep.subr.mxu0 0.0
        %1081 = vmatpush1.msra.mxu0 0.0
        %1082 = vmatprep.subr.mxu0 0.0
        %1083 = vmatpush1.msra.mxu0 0.0
        %1084 = vmatprep.subr.mxu0 0.0
        %1085 = vmatpush1.msra.mxu0 0.0
        %1086 = vmatprep.subr.mxu0 0.0
        %1087 = vmatpush1.msra.mxu0 0.0
        %1088 = vmatprep.subr.mxu0 0.0
        %1089 = vmatpush1.msra.mxu0 0.0
        %1090 = vmatprep.subr.mxu0 0.0
        %1091 = vmatpush1.msra.mxu0 0.0
        %1092 = vmatprep.subr.mxu0 0.0
        %1093 = vmatpush1.msra.mxu0 0.0
        %1094 = vmatprep.subr.mxu0 0.0
        %1095 = vmatpush1.msra.mxu0 0.0
        %1096 = vmatprep.subr.mxu0 0.0
        %1097 = vmatpush1.msra.mxu0 0.0
        %1098 = vmatprep.subr.mxu0 0.0
        %1099 = vmatpush1.msra.mxu0 0.0
        %1100 = vmatprep.subr.mxu0 0.0
        %1101 = vmatpush1.msra.mxu0 0.0
        %1102 = vmatprep.subr.mxu0 0.0
        %1103 = vmatpush1.msra.mxu0 0.0
        %1104 = vmatprep.subr.mxu0 0.0
        %1105 = vmatpush1.msra.mxu0 0.0
        %1106 = vmatprep.subr.mxu0 0.0
        %1107 = vmatpush1.msra.mxu0 0.0
        %1108 = vmatprep.subr.mxu0 0.0
        %1109 = vmatpush1.msra.mxu0 0.0
        %1110 = vmatprep.mubr.f32.mxu0 0.0
        %1111 = vmatmul.mubr.f32.gmra.mrb[0].mxu0 %v1044
        %v1112 = vpop.f32.mrb[0].mxu0
        %v1113 = vadd.f32 0.0, %v1112
        %v1114 = vpop.f32.mrb[0].mxu0
        %1115 = vdwg.mxu0
        %v1116 = vadd.f32 %v1010, %v1113
        %v1117 = vmax.f32 %v1116, 0.0
        %v1118 = vld [vmem:[%s8] sm:$0x1]
        %v1119 = vmul.f32 %v1117, %v1118
        %v1120 = vld [vmem:[%s9] sm:$0x1]
        %v1121 = vadd.f32 %v1119, %v1120
        %v1122 = vld [vmem:[%s10] sm:$0xff]
        %v1123 = vld [vmem:[%s10 + $0x8] sm:$0xff]
        %v1124 = vld [vmem:[%s10 + $0x10] sm:$0xff]
        %v1125 = vld [vmem:[%s10 + $0x18] sm:$0xff]
        %v1126 = vld [vmem:[%s10 + $0x20] sm:$0xff]
        %v1127 = vld [vmem:[%s10 + $0x28] sm:$0xff]
        %v1128 = vld [vmem:[%s10 + $0x30] sm:$0xff]
        %v1129 = vld [vmem:[%s10 + $0x38] sm:$0xff]
        %v1130 = vld [vmem:[%s495] sm:$0x1]
        %v1131 = vld [vmem:[%s11] sm:$0xff]
        %v1132 = vld [vmem:[%s11 + $0x8] sm:$0xff]
        %v1133 = vld [vmem:[%s11 + $0x10] sm:$0x1]
        %vm1134 = vcmask 138240
        %v1136 = vsel %vm1134, %v1130, 0
        %v1139 = vsel %vm506, %v1133, 0
        %1141 = vmatprep.subr.mxu0 0.0
        %1142 = vmatpush1.msra.mxu0 %v1131
        %1143 = vmatprep.subr.mxu0 0.0
        %1144 = vmatpush1.msra.mxu0 %v1132
        %1145 = vmatprep.subr.mxu0 0.0
        %1146 = vmatpush1.msra.mxu0 %v1139
        %1147 = vmatprep.subr.mxu0 0.0
        %1148 = vmatpush1.msra.mxu0 0.0
        %1149 = vmatprep.subr.mxu0 0.0
        %1150 = vmatpush1.msra.mxu0 0.0
        %1151 = vmatprep.subr.mxu0 0.0
        %1152 = vmatpush1.msra.mxu0 0.0
        %1153 = vmatprep.subr.mxu0 0.0
        %1154 = vmatpush1.msra.mxu0 0.0
        %1155 = vmatprep.subr.mxu0 0.0
        %1156 = vmatpush1.msra.mxu0 0.0
        %1157 = vmatprep.subr.mxu0 0.0
        %1158 = vmatpush1.msra.mxu0 0.0
        %1159 = vmatprep.subr.mxu0 0.0
        %1160 = vmatpush1.msra.mxu0 0.0
        %1161 = vmatprep.subr.mxu0 0.0
        %1162 = vmatpush1.msra.mxu0 0.0
        %1163 = vmatprep.subr.mxu0 0.0
        %1164 = vmatpush1.msra.mxu0 0.0
        %1165 = vmatprep.subr.mxu0 0.0
        %1166 = vmatpush1.msra.mxu0 0.0
        %1167 = vmatprep.subr.mxu0 0.0
        %1168 = vmatpush1.msra.mxu0 0.0
        %1169 = vmatprep.subr.mxu0 0.0
        %1170 = vmatpush1.msra.mxu0 0.0
        %1171 = vmatprep.subr.mxu0 0.0
        %1172 = vmatpush1.msra.mxu0 0.0
        %1173 = vmatprep.subr.mxu0 0.0
        %1174 = vmatpush1.msra.mxu0 0.0
        %1175 = vmatprep.subr.mxu0 0.0
        %1176 = vmatpush1.msra.mxu0 0.0
        %1177 = vmatprep.subr.mxu0 0.0
        %1178 = vmatpush1.msra.mxu0 0.0
        %1179 = vmatprep.subr.mxu0 0.0
        %1180 = vmatpush1.msra.mxu0 0.0
        %1181 = vmatprep.subr.mxu0 0.0
        %1182 = vmatpush1.msra.mxu0 0.0
        %1183 = vmatprep.subr.mxu0 0.0
        %1184 = vmatpush1.msra.mxu0 0.0
        %1185 = vmatprep.subr.mxu0 0.0
        %1186 = vmatpush1.msra.mxu0 0.0
        %1187 = vmatprep.subr.mxu0 0.0
        %1188 = vmatpush1.msra.mxu0 0.0
        %1189 = vmatprep.subr.mxu0 0.0
        %1190 = vmatpush1.msra.mxu0 0.0
        %1191 = vmatprep.subr.mxu0 0.0
        %1192 = vmatpush1.msra.mxu0 0.0
        %1193 = vmatprep.subr.mxu0 0.0
        %1194 = vmatpush1.msra.mxu0 0.0
        %1195 = vmatprep.subr.mxu0 0.0
        %1196 = vmatpush1.msra.mxu0 0.0
        %1197 = vmatprep.subr.mxu0 0.0
        %1198 = vmatpush1.msra.mxu0 0.0
        %1199 = vmatprep.subr.mxu0 0.0
        %1200 = vmatpush1.msra.mxu0 0.0
        %1201 = vmatprep.subr.mxu0 0.0
        %1202 = vmatpush1.msra.mxu0 0.0
        %1203 = vmatprep.subr.mxu0 0.0
        %1204 = vmatpush1.msra.mxu0 0.0
        %1205 = vmatprep.mubr.f32.mxu0 0.0
        %1206 = vmatmul.mubr.f32.gmra.mrb[0].mxu0 %v1136
        %v1207 = vpop.f32.mrb[0].mxu0
        %v1208 = vadd.f32 0.0, %v1207
        %v1209 = vpop.f32.mrb[0].mxu0
        %1210 = vdwg.mxu0
        %v1212 = vsel %vm809, %v1121, 0
        %1214 = vmatprep.subr.mxu0 0.0
        %1215 = vmatpush1.msra.mxu0 %v1122
        %1216 = vmatprep.subr.mxu0 0.0
        %1217 = vmatpush1.msra.mxu0 %v1123
        %1218 = vmatprep.subr.mxu0 0.0
        %1219 = vmatpush1.msra.mxu0 %v1124
        %1220 = vmatprep.subr.mxu0 0.0
        %1221 = vmatpush1.msra.mxu0 %v1125
        %1222 = vmatprep.subr.mxu0 0.0
        %1223 = vmatpush1.msra.mxu0 %v1126
        %1224 = vmatprep.subr.mxu0 0.0
        %1225 = vmatpush1.msra.mxu0 %v1127
        %1226 = vmatprep.subr.mxu0 0.0
        %1227 = vmatpush1.msra.mxu0 %v1128
        %1228 = vmatprep.subr.mxu0 0.0
        %1229 = vmatpush1.msra.mxu0 %v1129
        %1230 = vmatprep.subr.mxu0 0.0
        %1231 = vmatpush1.msra.mxu0 0.0
        %1232 = vmatprep.subr.mxu0 0.0
        %1233 = vmatpush1.msra.mxu0 0.0
        %1234 = vmatprep.subr.mxu0 0.0
        %1235 = vmatpush1.msra.mxu0 0.0
        %1236 = vmatprep.subr.mxu0 0.0
        %1237 = vmatpush1.msra.mxu0 0.0
        %1238 = vmatprep.subr.mxu0 0.0
        %1239 = vmatpush1.msra.mxu0 0.0
        %1240 = vmatprep.subr.mxu0 0.0
        %1241 = vmatpush1.msra.mxu0 0.0
        %1242 = vmatprep.subr.mxu0 0.0
        %1243 = vmatpush1.msra.mxu0 0.0
        %1244 = vmatprep.subr.mxu0 0.0
        %1245 = vmatpush1.msra.mxu0 0.0
        %1246 = vmatprep.subr.mxu0 0.0
        %1247 = vmatpush1.msra.mxu0 0.0
        %1248 = vmatprep.subr.mxu0 0.0
        %1249 = vmatpush1.msra.mxu0 0.0
        %1250 = vmatprep.subr.mxu0 0.0
        %1251 = vmatpush1.msra.mxu0 0.0
        %1252 = vmatprep.subr.mxu0 0.0
        %1253 = vmatpush1.msra.mxu0 0.0
        %1254 = vmatprep.subr.mxu0 0.0
        %1255 = vmatpush1.msra.mxu0 0.0
        %1256 = vmatprep.subr.mxu0 0.0
        %1257 = vmatpush1.msra.mxu0 0.0
        %1258 = vmatprep.subr.mxu0 0.0
        %1259 = vmatpush1.msra.mxu0 0.0
        %1260 = vmatprep.subr.mxu0 0.0
        %1261 = vmatpush1.msra.mxu0 0.0
        %1262 = vmatprep.subr.mxu0 0.0
        %1263 = vmatpush1.msra.mxu0 0.0
        %1264 = vmatprep.subr.mxu0 0.0
        %1265 = vmatpush1.msra.mxu0 0.0
        %1266 = vmatprep.subr.mxu0 0.0
        %1267 = vmatpush1.msra.mxu0 0.0
        %1268 = vmatprep.subr.mxu0 0.0
        %1269 = vmatpush1.msra.mxu0 0.0
        %1270 = vmatprep.subr.mxu0 0.0
        %1271 = vmatpush1.msra.mxu0 0.0
        %1272 = vmatprep.subr.mxu0 0.0
        %1273 = vmatpush1.msra.mxu0 0.0
        %1274 = vmatprep.subr.mxu0 0.0
        %1275 = vmatpush1.msra.mxu0 0.0
        %1276 = vmatprep.subr.mxu0 0.0
        %1277 = vmatpush1.msra.mxu0 0.0
        %1278 = vmatprep.mubr.f32.mxu0 0.0
        %1279 = vmatmul.mubr.f32.gmra.mrb[0].mxu0 %v1212
        %v1280 = vpop.f32.mrb[0].mxu0
        %v1281 = vadd.f32 %v1208, %v1280
        %v1282 = vpop.f32.mrb[0].mxu0
        %1283 = vdwg.mxu0
        %v1284 = vld [vmem:[%s12] sm:$0x1]
        %v1285 = vadd.f32 %v1281, %v1284
        %vm1286 = vcmask 16384
        %1287 = vst.msk [vmem:[%s483] sm:$0x1] %vm1286, %v1285
        %s1288 = sand.u32 %s345, 1
        %s1289 = scalar_lea.sflag [#allocation4], %s1288
        %s1290 = sand.u32 %s345, 1
        %s1291 = scalar_lea.vmem [#allocation3], %s1290
        // Predicated region
        $region77: #{tpu_custom_call.1} parent=75 // pred_check
          %p1292 = pneg %p355
        $region78: #{tpu_custom_call.1} parent=75 // pred_check_branch
          %1294 = sbr.rel (%p1292) target = $region80
        $region79: #{tpu_custom_call.1} parent=75 // pred_region
          %s1296 = ssub.s32 16, 16
          %1297 = vsyncadd %s1289, %s1296
          %s1298 = smul.addr %s28, 16
          %s1299 = scalar_lea.hbm %s14, %s1298
          %s1301 = sshll.u32 %s1291, 4
          %s1302 = int_to_ptr.vmem [resolvable:$true] %s1301
          %1304 = dma.vmem_to_hbm [thread:$0]  %s1302, 16, %s1299, %s1289
        $region80: #{tpu_custom_call.1} parent=75 // pred_fallthru
          _
      $region76: #{tpu_custom_call.1} parent=5 // pred_fallthru
        _
      %p1305 = scmp.le.s32.totalorder 2, %s23
      // Predicated region
      $region81: #{tpu_custom_call.1} parent=5 // pred_check
        %p1306 = pneg %p1305
      $region82: #{tpu_custom_call.1} parent=5 // pred_check_branch
        %1308 = sbr.rel (%p1306) target = $region84
      $region83: #{tpu_custom_call.1} parent=5 // pred_region
        %s1309 = ssub.s32 %s23, 2
        // Predicated region
        $region85: #{tpu_custom_call.1} parent=83 // pred_check
          %p1310 = pneg %p361
        $region86: #{tpu_custom_call.1} parent=83 // pred_check_branch
          %1312 = sbr.rel (%p1310) target = $region88
        $region87: #{tpu_custom_call.1} parent=83 // pred_region
          %s1313 = sand.u32 %s346, 1
          %s1314 = scalar_lea.sflag [#allocation4], %s1313
          %s1315 = sand.u32 %s346, 1
          %s1316 = scalar_lea.vmem [#allocation3], %s1315
          %1317 = dma.done %s1314, 16
        $region88: #{tpu_custom_call.1} parent=83 // pred_fallthru
          _
      $region84: #{tpu_custom_call.1} parent=5 // pred_fallthru
        _
    $region6: #{tpu_custom_call.1} parent=1 // loop_footer
      %s27 = sadd.s32 1, %s23
    $region7: #{tpu_custom_call.1} parent=1 // loop_footer_branch
      %22 = sbr.rel target = $region3
    $region8: #{tpu_custom_call.1} parent=1 // loop_exit
      _
    %1318 = vsyncpa [#allocation4], 1
    %s1319 = scalar_lea.sflag [#allocation4], 1
    %1320 = vsyncpa %s1319, 1

</llo_original>
